<compile_context>
chip_gen: v5e
topology: v5e:2x2
jax: 0.10.0
libtpu: 0.0.40
codegen_flags: <defaults>
</compile_context>

<pallas_src>
import jax
import jax.numpy as jnp
from jax import lax
from jax.experimental import pallas as pl
from jax.experimental.pallas import tpu as pltpu


# ---------------------------------------------------------------------------
# helpers
# ---------------------------------------------------------------------------
def _round_up(x, m):
    return ((x + m - 1) // m) * m


def _sigmoid_eup(z):
    # logistic via tanh identity: transcendental goes to the EUP slot, no VALU divide.
    return 0.5 * (jnp.tanh(0.5 * z) + 1.0)


# ---------------------------------------------------------------------------
# LSTM kernel (stacked layers, time-major, hoisted input projection)
# ---------------------------------------------------------------------------
def lstm_kernel(
    x_ref,       # (T*Bp, Vp)       bf16, time-major flattened input
    h0_ref,      # (L, Bp, Hp)      f32
    c0_ref,      # (L, Bp, Hp)      f32
    w_ih0_ref,   # (Vp, 4*Hp)       bf16   layer-0 input weights (pre-transposed, per-gate padded)
    w_ihr_ref,   # (max(L-1,1), Hp, 4*Hp)  bf16
    w_hh_ref,    # (L, Hp, 4*Hp)    bf16
    b_ref,       # (L, 1, 4*Hp)     f32    (b_ih + b_hh)
    seq_ref,     # OUT (T*Bp, Hp)   f32    last-layer sequence output (time-major)
    hn_ref,      # OUT (L, Bp, Hp)  f32
    cn_ref,      # OUT (L, Bp, Hp)  f32
    pg_ref,      # scratch (T*Bp, 4*Hp) f32   pre-gates for the current layer
):
    L, Bp, Hp = h0_ref.shape
    TB = x_ref.shape[0]
    T = TB // Bp

    for layer in range(L):  # static python loop over layers (sequential dependency)
        # ---- hoisted input projection for ALL timesteps: one big MXU matmul ----
        if layer == 0:
            inp = x_ref[...]                                   # (T*Bp, Vp) bf16
            w_ih = w_ih0_ref[...]                              # (Vp, 4Hp)  bf16
        else:
            inp = seq_ref[...].astype(jnp.bfloat16)            # (T*Bp, Hp) bf16
            w_ih = w_ihr_ref[layer - 1]                        # (Hp, 4Hp)  bf16
        bias = b_ref[layer]                                    # (1, 4Hp)   f32
        pg_ref[...] = (
            jnp.dot(inp, w_ih, preferred_element_type=jnp.float32) + bias
        )

        w_hh_l = w_hh_ref[layer]                               # (Hp, 4Hp) bf16, hoisted load
        h0 = h0_ref[layer]                                     # (Bp, Hp) f32
        c0 = c0_ref[layer]

        def step(t, carry, _w_hh=w_hh_l):
            h, c = carry
            idx = pl.multiple_of(t * Bp, Bp)                   # sublane-aligned row offset
            gates = pg_ref[pl.ds(idx, Bp), :] + jnp.dot(
                h.astype(jnp.bfloat16), _w_hh,
                preferred_element_type=jnp.float32,
            )                                                  # (Bp, 4Hp) f32, gate order i,f,g,o
            i_g = _sigmoid_eup(gates[:, 0 * Hp:1 * Hp])
            f_g = _sigmoid_eup(gates[:, 1 * Hp:2 * Hp])
            g_g = jnp.tanh(gates[:, 2 * Hp:3 * Hp])
            o_g = _sigmoid_eup(gates[:, 3 * Hp:4 * Hp])
            c_new = f_g * c + i_g * g_g
            h_new = o_g * jnp.tanh(c_new)
            seq_ref[pl.ds(idx, Bp), :] = h_new                 # full (8,128) tile store
            return (h_new, c_new)

        h_fin, c_fin = lax.fori_loop(0, T, step, (h0, c0))
        hn_ref[layer] = h_fin
        cn_ref[layer] = c_fin
        # TODO(synk): PyTorch applies inter-layer dropout only in training mode; eval
        # semantics (identity) are implemented here.


# ---------------------------------------------------------------------------
# FC kernel (row-tiled, lane-dense output, batch-parallel grid axis)
# ---------------------------------------------------------------------------
def fc_kernel(x_ref, w_ref, b_ref, o_ref):
    o_ref[...] = (
        jnp.dot(x_ref[...].astype(jnp.bfloat16), w_ref[...],
                preferred_element_type=jnp.float32)
        + b_ref[...]
    )


# ---------------------------------------------------------------------------
# wrapper
# ---------------------------------------------------------------------------
def _pad_gate_mat(w, in_dim, H, in_pad, Hp):
    """(..., in_dim, 4H) -> (..., in_pad, 4*Hp) with per-gate (i,f,g,o) padding."""
    lead = w.shape[:-2]
    w4 = w.reshape(lead + (in_dim, 4, H))
    out = jnp.zeros(lead + (in_pad, 4, Hp), w.dtype)
    out = out.at[..., :in_dim, :, :H].set(w4)
    return out.reshape(lead + (in_pad, 4 * Hp))


def _pad_params(params, V, H, L, Vp, Hp):
    p = {}
    p["w_ih0"] = _pad_gate_mat(params["w_ih0_T"], V, H, Vp, Hp).astype(jnp.bfloat16)
    if L > 1:
        p["w_ihr"] = _pad_gate_mat(params["w_ihr_T"], H, H, Hp, Hp).astype(jnp.bfloat16)
    else:
        p["w_ihr"] = jnp.zeros((1, Hp, 4 * Hp), jnp.bfloat16)
    p["w_hh"] = _pad_gate_mat(params["w_hh_T"], H, H, Hp, Hp).astype(jnp.bfloat16)

    b4 = params["b"].reshape(L, 1, 4, H)
    b_p = jnp.zeros((L, 1, 4, Hp), jnp.float32).at[..., :H].set(b4)
    p["b"] = b_p.reshape(L, 1, 4 * Hp)

    p["w_fc"] = (
        jnp.zeros((Hp, Vp), jnp.float32).at[:H, :V].set(params["w_fc_T"])
    ).astype(jnp.bfloat16)
    p["b_fc"] = jnp.zeros((1, Vp), jnp.float32).at[:, :V].set(params["b_fc"])
    return p


def music_rnn_forward(x, h0, c0, params):
    """Pallas forward: returns (out (B*T, V), (h_n, c_n))."""
    B, T, V = x.shape
    L, _, H = h0.shape

    Bp = _round_up(B, 8)
    Hp = _round_up(H, 128)
    Vp = _round_up(V, 128)

    p = _pad_params(params, V, H, L, Vp, Hp)

    # --- pad + time-major flatten inputs (layout plumbing in the wrapper) ---
    x_p = jnp.zeros((Bp, T, Vp), jnp.float32).at[:B, :, :V].set(x)
    x_tm = jnp.transpose(x_p, (1, 0, 2)).reshape(T * Bp, Vp).astype(jnp.bfloat16)

    h0_p = jnp.zeros((L, Bp, Hp), jnp.float32).at[:, :B, :H].set(h0)
    c0_p = jnp.zeros((L, Bp, Hp), jnp.float32).at[:, :B, :H].set(c0)

    vmem = pl.BlockSpec(memory_space=pltpu.MemorySpace.VMEM)

    lstm_flops = (
        2 * T * Bp * Vp * 4 * Hp
        + 2 * max(L - 1, 0) * T * Bp * Hp * 4 * Hp
        + 2 * L * T * Bp * Hp * 4 * Hp
    )
    lstm_trans = L * T * Bp * 5 * Hp
    lstm_bytes = (
        x_tm.size * 2 + (h0_p.size + c0_p.size) * 4
        + (p["w_ih0"].size + p["w_ihr"].size + p["w_hh"].size) * 2
        + p["b"].size * 4
        + T * Bp * Hp * 4 + 2 * L * Bp * Hp * 4
    )

    seq_flat, hn_p, cn_p = pl.pallas_call(
        lstm_kernel,
        out_shape=(
            jax.ShapeDtypeStruct((T * Bp, Hp), jnp.float32),
            jax.ShapeDtypeStruct((L, Bp, Hp), jnp.float32),
            jax.ShapeDtypeStruct((L, Bp, Hp), jnp.float32),
        ),
        in_specs=[vmem] * 7,
        out_specs=(vmem, vmem, vmem),
        scratch_shapes=[pltpu.VMEM((T * Bp, 4 * Hp), jnp.float32)],
        cost_estimate=pl.CostEstimate(
            flops=int(lstm_flops),
            transcendentals=int(lstm_trans),
            bytes_accessed=int(lstm_bytes),
        ),
    )(x_tm, h0_p, c0_p, p["w_ih0"], p["w_ihr"], p["w_hh"], p["b"])
    # TODO(synk): for large T/B/vocab (esp. v7x's 64 MiB VMEM) the LSTM buffers should be
    # chunked over T; at these model sizes the whole working set is a few hundred KiB.

    # --- last-layer outputs, back to PyTorch's batch-major flattening (B*T, H) ---
    seq = seq_flat.reshape(T, Bp, Hp)
    flat = jnp.transpose(seq, (1, 0, 2))[:B].reshape(B * T, Hp)

    rows = B * T
    tile_m = 128 if rows >= 128 else 8
    rows_p = _round_up(rows, tile_m)
    flat_p = jnp.zeros((rows_p, Hp), jnp.float32).at[:rows].set(flat)

    out_p = pl.pallas_call(
        fc_kernel,
        out_shape=jax.ShapeDtypeStruct((rows_p, Vp), jnp.float32),
        grid=(rows_p // tile_m,),
        in_specs=[
            pl.BlockSpec((tile_m, Hp), lambda i: (i, 0)),
            pl.BlockSpec((Hp, Vp), lambda i: (0, 0)),
            pl.BlockSpec((1, Vp), lambda i: (0, 0)),
        ],
        out_specs=pl.BlockSpec((tile_m, Vp), lambda i: (i, 0)),
        compiler_params=pltpu.CompilerParams(dimension_semantics=("parallel",)),
        cost_estimate=pl.CostEstimate(
            flops=int(2 * rows_p * Hp * Vp),
            transcendentals=0,
            bytes_accessed=int(rows_p * Hp * 4 + Hp * Vp * 2 + Vp * 4 + rows_p * Vp * 4),
        ),
    )(flat_p, p["w_fc"], p["b_fc"])

    out = out_p[:rows, :V]
    h_n = hn_p[:, :B, :H]
    c_n = cn_p[:, :B, :H]
    return out, (h_n, c_n)


# ---------------------------------------------------------------------------
# pure-JAX reference (same bf16-matmul / f32-accumulate math) for a sanity check
# ---------------------------------------------------------------------------
def music_rnn_reference(x, h0, c0, params):
    B, T, V = x.shape
    L, _, H = h0.shape
    bf = lambda a: a.astype(jnp.bfloat16)
    seq = x
    hs, cs = [], []
    for layer in range(L):
        w_ih = params["w_ih0_T"] if layer == 0 else params["w_ihr_T"][layer - 1]
        w_hh = params["w_hh_T"][layer]
        bias = params["b"][layer]
        h, c = h0[layer], c0[layer]
        outs = []
        for t in range(T):
            x_t = seq[:, t, :]
            g = (
                jnp.dot(bf(x_t), bf(w_ih), preferred_element_type=jnp.float32)
                + jnp.dot(bf(h), bf(w_hh), preferred_element_type=jnp.float32)
                + bias
            )
            i_g = jax.nn.sigmoid(g[:, 0 * H:1 * H])
            f_g = jax.nn.sigmoid(g[:, 1 * H:2 * H])
            g_g = jnp.tanh(g[:, 2 * H:3 * H])
            o_g = jax.nn.sigmoid(g[:, 3 * H:4 * H])
            c = f_g * c + i_g * g_g
            h = o_g * jnp.tanh(c)
            outs.append(h)
        seq = jnp.stack(outs, axis=1)
        hs.append(h)
        cs.append(c)
    flat = seq.reshape(B * T, H)
    out = (
        jnp.dot(bf(flat), bf(params["w_fc_T"]), preferred_element_type=jnp.float32)
        + params["b_fc"]
    )
    return out, (jnp.stack(hs), jnp.stack(cs))


def init_params(key, vocab, n_hidden, n_layers):
    k = 1.0 / jnp.sqrt(jnp.float32(n_hidden))
    keys = jax.random.split(key, 8)
    u = lambda kk, shape: jax.random.uniform(kk, shape, jnp.float32, -k, k)
    H, V, L = n_hidden, vocab, n_layers
    return {
        "w_ih0_T": u(keys[0], (V, 4 * H)),
        "w_ihr_T": u(keys[1], (max(L - 1, 1), H, 4 * H)),
        "w_hh_T":  u(keys[2], (L, H, 4 * H)),
        # combined bias b_ih + b_hh, kept 3-D so per-layer slices are 2-D
        "b":       u(keys[3], (L, 1, 4 * H)) + u(keys[4], (L, 1, 4 * H)),
        "w_fc_T":  u(keys[5], (H, V)),
        "b_fc":    u(keys[6], (1, V)),
    }


if __name__ == "__main__":
    VOCAB, N_HIDDEN, N_LAYERS = 16, 32, 3
    B, T = 2, 8

    key = jax.random.PRNGKey(0)
    k_x, k_p = jax.random.split(key)

    x = jax.random.normal(k_x, (B, T, VOCAB), jnp.float32)
    h0 = jnp.zeros((N_LAYERS, B, N_HIDDEN), jnp.float32)   # == model.init_hidden(B)
    c0 = jnp.zeros((N_LAYERS, B, N_HIDDEN), jnp.float32)
    params = init_params(k_p, VOCAB, N_HIDDEN, N_LAYERS)

    fwd = jax.jit(music_rnn_forward)
    out, (h_n, c_n) = fwd(x, h0, c0, params)
    jax.block_until_ready((out, h_n, c_n))

    # sanity check against pure-JAX reference (same bf16-matmul math)
    out_r, (h_r, c_r) = music_rnn_reference(x, h0, c0, params)
    assert out.shape == (B * T, VOCAB)
    assert h_n.shape == (N_LAYERS, B, N_HIDDEN) and c_n.shape == (N_LAYERS, B, N_HIDDEN)
    assert jnp.allclose(out, out_r, atol=1e-2, rtol=1e-2)
    assert jnp.allclose(h_n, h_r, atol=1e-2, rtol=1e-2)
    assert jnp.allclose(c_n, c_r, atol=1e-2, rtol=1e-2)

    print("KERNEL_OK")
</pallas_src>

<mosaic_0001>
module attributes {stable_mosaic.version = 11 : i64} {
  func.func @lstm_kernel(%arg0: memref<64x128xbf16, #tpu.memory_space<vmem>>, %arg1: memref<3x8x128xf32, #tpu.memory_space<vmem>>, %arg2: memref<3x8x128xf32, #tpu.memory_space<vmem>>, %arg3: memref<128x512xbf16, #tpu.memory_space<vmem>>, %arg4: memref<2x128x512xbf16, #tpu.memory_space<vmem>>, %arg5: memref<3x128x512xbf16, #tpu.memory_space<vmem>>, %arg6: memref<3x1x512xf32, #tpu.memory_space<vmem>>, %arg7: memref<64x128xf32, #tpu.memory_space<vmem>>, %arg8: memref<3x8x128xf32, #tpu.memory_space<vmem>>, %arg9: memref<3x8x128xf32, #tpu.memory_space<vmem>>, %arg10: memref<64x512xf32, #tpu.memory_space<vmem>>) attributes {dimension_semantics = [], scalar_prefetch = 0 : i64, scratch_operands = 1 : i64, tpu.core_type = #tpu.core_type<tc>} {
    %c0 = arith.constant 0 : index
    %c0_0 = arith.constant 0 : index
    %0 = vector.load %arg0[%c0, %c0_0] : memref<64x128xbf16, #tpu.memory_space<vmem>>, vector<64x128xbf16>
    %c0_1 = arith.constant 0 : index
    %c0_2 = arith.constant 0 : index
    %1 = vector.load %arg3[%c0_1, %c0_2] : memref<128x512xbf16, #tpu.memory_space<vmem>>, vector<128x512xbf16>
    %c0_3 = arith.constant 0 : index
    %c0_4 = arith.constant 0 : index
    %c0_5 = arith.constant 0 : index
    %2 = vector.load %arg6[%c0_3, %c0_4, %c0_5] : memref<3x1x512xf32, #tpu.memory_space<vmem>>, vector<1x1x512xf32>
    %3 = vector.shape_cast %2 : vector<1x1x512xf32> to vector<1x512xf32>
    %cst = arith.constant dense<0.000000e+00> : vector<64x512xf32>
    %4 = tpu.matmul %0, %1, %cst {dimension_numbers = #tpu.dot_dimension_numbers<[1], [0], [0], [1], [0, 0, 1, 1], [], []>} : vector<64x128xbf16>, vector<128x512xbf16>, vector<64x512xf32> -> vector<64x512xf32>
    %5 = vector.broadcast %3 : vector<1x512xf32> to vector<64x512xf32>
    %6 = arith.addf %4, %5 : vector<64x512xf32>
    %c0_6 = arith.constant 0 : index
    %c0_7 = arith.constant 0 : index
    %7 = vector.load %arg10[%c0_6, %c0_7] : memref<64x512xf32, #tpu.memory_space<vmem>>, vector<64x512xf32>
    tpu.vector_store %arg10[%c0_6, %c0_7], %6 {strides = array<i32>} : memref<64x512xf32, #tpu.memory_space<vmem>>, vector<64x512xf32>,
    %c0_8 = arith.constant 0 : index
    %c0_9 = arith.constant 0 : index
    %c0_10 = arith.constant 0 : index
    %8 = vector.load %arg5[%c0_8, %c0_9, %c0_10] : memref<3x128x512xbf16, #tpu.memory_space<vmem>>, vector<1x128x512xbf16>
    %9 = vector.shape_cast %8 : vector<1x128x512xbf16> to vector<128x512xbf16>
    %c0_11 = arith.constant 0 : index
    %c0_12 = arith.constant 0 : index
    %c0_13 = arith.constant 0 : index
    %10 = vector.load %arg1[%c0_11, %c0_12, %c0_13] : memref<3x8x128xf32, #tpu.memory_space<vmem>>, vector<1x8x128xf32>
    %11 = vector.shape_cast %10 : vector<1x8x128xf32> to vector<8x128xf32>
    %c0_14 = arith.constant 0 : index
    %c0_15 = arith.constant 0 : index
    %c0_16 = arith.constant 0 : index
    %12 = vector.load %arg2[%c0_14, %c0_15, %c0_16] : memref<3x8x128xf32, #tpu.memory_space<vmem>>, vector<1x8x128xf32>
    %13 = vector.shape_cast %12 : vector<1x8x128xf32> to vector<8x128xf32>
    %c0_i32 = arith.constant 0 : i32
    %c8_i32 = arith.constant 8 : i32
    %14 = arith.addi %c0_i32, %c8_i32 : i32
    %c1_i32 = arith.constant 1 : i32
    %15:2 = scf.for %arg11 = %c0_i32 to %14 step %c1_i32 iter_args(%arg12 = %11, %arg13 = %13) -> (vector<8x128xf32>, vector<8x128xf32>)  : i32 {
      %c8_i32_82 = arith.constant 8 : i32
      %70 = arith.muli %arg11, %c8_i32_82 : i32
      %71 = tpu.assume_multiple %70, 8 : i32
      %72 = arith.index_cast %71 : i32 to index
      %c0_83 = arith.constant 0 : index
      %73 = vector.load %arg10[%72, %c0_83] : memref<64x512xf32, #tpu.memory_space<vmem>>, vector<8x512xf32>
      %74 = arith.truncf %arg12 : vector<8x128xf32> to vector<8x128xbf16>
      %cst_84 = arith.constant dense<0.000000e+00> : vector<8x512xf32>
      %75 = tpu.matmul %74, %9, %cst_84 {dimension_numbers = #tpu.dot_dimension_numbers<[1], [0], [0], [1], [0, 0, 1, 1], [], []>} : vector<8x128xbf16>, vector<128x512xbf16>, vector<8x512xf32> -> vector<8x512xf32>
      %76 = arith.addf %73, %75 : vector<8x512xf32>
      %77 = vector.extract_strided_slice %76 {offsets = [0, 0], sizes = [8, 128], strides = [1, 1]} : vector<8x512xf32> to vector<8x128xf32>
      %cst_85 = arith.constant 5.000000e-01 : f32
      %78 = vector.broadcast %cst_85 : f32 to vector<8x128xf32>
      %79 = arith.mulf %78, %77 : vector<8x128xf32>
      %80 = math.tanh %79 : vector<8x128xf32>
      %cst_86 = arith.constant 1.000000e+00 : f32
      %81 = vector.broadcast %cst_86 : f32 to vector<8x128xf32>
      %82 = arith.addf %80, %81 : vector<8x128xf32>
      %cst_87 = arith.constant 5.000000e-01 : f32
      %83 = vector.broadcast %cst_87 : f32 to vector<8x128xf32>
      %84 = arith.mulf %83, %82 : vector<8x128xf32>
      %85 = vector.extract_strided_slice %76 {offsets = [0, 128], sizes = [8, 128], strides = [1, 1]} : vector<8x512xf32> to vector<8x128xf32>
      %cst_88 = arith.constant 5.000000e-01 : f32
      %86 = vector.broadcast %cst_88 : f32 to vector<8x128xf32>
      %87 = arith.mulf %86, %85 : vector<8x128xf32>
      %88 = math.tanh %87 : vector<8x128xf32>
      %cst_89 = arith.constant 1.000000e+00 : f32
      %89 = vector.broadcast %cst_89 : f32 to vector<8x128xf32>
      %90 = arith.addf %88, %89 : vector<8x128xf32>
      %cst_90 = arith.constant 5.000000e-01 : f32
      %91 = vector.broadcast %cst_90 : f32 to vector<8x128xf32>
      %92 = arith.mulf %91, %90 : vector<8x128xf32>
      %93 = vector.extract_strided_slice %76 {offsets = [0, 256], sizes = [8, 128], strides = [1, 1]} : vector<8x512xf32> to vector<8x128xf32>
      %94 = math.tanh %93 : vector<8x128xf32>
      %95 = vector.extract_strided_slice %76 {offsets = [0, 384], sizes = [8, 128], strides = [1, 1]} : vector<8x512xf32> to vector<8x128xf32>
      %cst_91 = arith.constant 5.000000e-01 : f32
      %96 = vector.broadcast %cst_91 : f32 to vector<8x128xf32>
      %97 = arith.mulf %96, %95 : vector<8x128xf32>
      %98 = math.tanh %97 : vector<8x128xf32>
      %cst_92 = arith.constant 1.000000e+00 : f32
      %99 = vector.broadcast %cst_92 : f32 to vector<8x128xf32>
      %100 = arith.addf %98, %99 : vector<8x128xf32>
      %cst_93 = arith.constant 5.000000e-01 : f32
      %101 = vector.broadcast %cst_93 : f32 to vector<8x128xf32>
      %102 = arith.mulf %101, %100 : vector<8x128xf32>
      %103 = arith.mulf %92, %arg13 : vector<8x128xf32>
      %104 = arith.mulf %84, %94 : vector<8x128xf32>
      %105 = arith.addf %103, %104 : vector<8x128xf32>
      %106 = math.tanh %105 : vector<8x128xf32>
      %107 = arith.mulf %102, %106 : vector<8x128xf32>
      %108 = arith.index_cast %71 : i32 to index
      %c0_94 = arith.constant 0 : index
      %109 = vector.load %arg7[%108, %c0_94] : memref<64x128xf32, #tpu.memory_space<vmem>>, vector<8x128xf32>
      tpu.vector_store %arg7[%108, %c0_94], %107 {strides = array<i32>} : memref<64x128xf32, #tpu.memory_space<vmem>>, vector<8x128xf32>,
      scf.yield %107, %105 : vector<8x128xf32>, vector<8x128xf32>
    }
    %c8_i32_17 = arith.constant 8 : i32
    %c0_18 = arith.constant 0 : index
    %c0_19 = arith.constant 0 : index
    %c0_20 = arith.constant 0 : index
    %16 = vector.load %arg8[%c0_18, %c0_19, %c0_20] : memref<3x8x128xf32, #tpu.memory_space<vmem>>, vector<1x8x128xf32>
    %17 = vector.shape_cast %16 : vector<1x8x128xf32> to vector<8x128xf32>
    %18 = vector.shape_cast %15#0 : vector<8x128xf32> to vector<1x8x128xf32>
    tpu.vector_store %arg8[%c0_18, %c0_19, %c0_20], %18 {strides = array<i32>} : memref<3x8x128xf32, #tpu.memory_space<vmem>>, vector<1x8x128xf32>,
    %c0_21 = arith.constant 0 : index
    %c0_22 = arith.constant 0 : index
    %c0_23 = arith.constant 0 : index
    %19 = vector.load %arg9[%c0_21, %c0_22, %c0_23] : memref<3x8x128xf32, #tpu.memory_space<vmem>>, vector<1x8x128xf32>
    %20 = vector.shape_cast %19 : vector<1x8x128xf32> to vector<8x128xf32>
    %21 = vector.shape_cast %15#1 : vector<8x128xf32> to vector<1x8x128xf32>
    tpu.vector_store %arg9[%c0_21, %c0_22, %c0_23], %21 {strides = array<i32>} : memref<3x8x128xf32, #tpu.memory_space<vmem>>, vector<1x8x128xf32>,
    %c0_24 = arith.constant 0 : index
    %c0_25 = arith.constant 0 : index
    %22 = vector.load %arg7[%c0_24, %c0_25] : memref<64x128xf32, #tpu.memory_space<vmem>>, vector<64x128xf32>
    %23 = arith.truncf %22 : vector<64x128xf32> to vector<64x128xbf16>
    %c0_26 = arith.constant 0 : index
    %c0_27 = arith.constant 0 : index
    %c0_28 = arith.constant 0 : index
    %24 = vector.load %arg4[%c0_26, %c0_27, %c0_28] : memref<2x128x512xbf16, #tpu.memory_space<vmem>>, vector<1x128x512xbf16>
    %25 = vector.shape_cast %24 : vector<1x128x512xbf16> to vector<128x512xbf16>
    %c1 = arith.constant 1 : index
    %c0_29 = arith.constant 0 : index
    %c0_30 = arith.constant 0 : index
    %26 = vector.load %arg6[%c1, %c0_29, %c0_30] : memref<3x1x512xf32, #tpu.memory_space<vmem>>, vector<1x1x512xf32>
    %27 = vector.shape_cast %26 : vector<1x1x512xf32> to vector<1x512xf32>
    %cst_31 = arith.constant dense<0.000000e+00> : vector<64x512xf32>
    %28 = tpu.matmul %23, %25, %cst_31 {dimension_numbers = #tpu.dot_dimension_numbers<[1], [0], [0], [1], [0, 0, 1, 1], [], []>} : vector<64x128xbf16>, vector<128x512xbf16>, vector<64x512xf32> -> vector<64x512xf32>
    %29 = vector.broadcast %27 : vector<1x512xf32> to vector<64x512xf32>
    %30 = arith.addf %28, %29 : vector<64x512xf32>
    %c0_32 = arith.constant 0 : index
    %c0_33 = arith.constant 0 : index
    %31 = vector.load %arg10[%c0_32, %c0_33] : memref<64x512xf32, #tpu.memory_space<vmem>>, vector<64x512xf32>
    tpu.vector_store %arg10[%c0_32, %c0_33], %30 {strides = array<i32>} : memref<64x512xf32, #tpu.memory_space<vmem>>, vector<64x512xf32>,
    %c1_34 = arith.constant 1 : index
    %c0_35 = arith.constant 0 : index
    %c0_36 = arith.constant 0 : index
    %32 = vector.load %arg5[%c1_34, %c0_35, %c0_36] : memref<3x128x512xbf16, #tpu.memory_space<vmem>>, vector<1x128x512xbf16>
    %33 = vector.shape_cast %32 : vector<1x128x512xbf16> to vector<128x512xbf16>
    %c1_37 = arith.constant 1 : index
    %c0_38 = arith.constant 0 : index
    %c0_39 = arith.constant 0 : index
    %34 = vector.load %arg1[%c1_37, %c0_38, %c0_39] : memref<3x8x128xf32, #tpu.memory_space<vmem>>, vector<1x8x128xf32>
    %35 = vector.shape_cast %34 : vector<1x8x128xf32> to vector<8x128xf32>
    %c1_40 = arith.constant 1 : index
    %c0_41 = arith.constant 0 : index
    %c0_42 = arith.constant 0 : index
    %36 = vector.load %arg2[%c1_40, %c0_41, %c0_42] : memref<3x8x128xf32, #tpu.memory_space<vmem>>, vector<1x8x128xf32>
    %37 = vector.shape_cast %36 : vector<1x8x128xf32> to vector<8x128xf32>
    %c0_i32_43 = arith.constant 0 : i32
    %c8_i32_44 = arith.constant 8 : i32
    %38 = arith.addi %c0_i32_43, %c8_i32_44 : i32
    %c1_i32_45 = arith.constant 1 : i32
    %39:2 = scf.for %arg11 = %c0_i32_43 to %38 step %c1_i32_45 iter_args(%arg12 = %35, %arg13 = %37) -> (vector<8x128xf32>, vector<8x128xf32>)  : i32 {
      %c8_i32_82 = arith.constant 8 : i32
      %70 = arith.muli %arg11, %c8_i32_82 : i32
      %71 = tpu.assume_multiple %70, 8 : i32
      %72 = arith.index_cast %71 : i32 to index
      %c0_83 = arith.constant 0 : index
      %73 = vector.load %arg10[%72, %c0_83] : memref<64x512xf32, #tpu.memory_space<vmem>>, vector<8x512xf32>
      %74 = arith.truncf %arg12 : vector<8x128xf32> to vector<8x128xbf16>
      %cst_84 = arith.constant dense<0.000000e+00> : vector<8x512xf32>
      %75 = tpu.matmul %74, %33, %cst_84 {dimension_numbers = #tpu.dot_dimension_numbers<[1], [0], [0], [1], [0, 0, 1, 1], [], []>} : vector<8x128xbf16>, vector<128x512xbf16>, vector<8x512xf32> -> vector<8x512xf32>
      %76 = arith.addf %73, %75 : vector<8x512xf32>
      %77 = vector.extract_strided_slice %76 {offsets = [0, 0], sizes = [8, 128], strides = [1, 1]} : vector<8x512xf32> to vector<8x128xf32>
      %cst_85 = arith.constant 5.000000e-01 : f32
      %78 = vector.broadcast %cst_85 : f32 to vector<8x128xf32>
      %79 = arith.mulf %78, %77 : vector<8x128xf32>
      %80 = math.tanh %79 : vector<8x128xf32>
      %cst_86 = arith.constant 1.000000e+00 : f32
      %81 = vector.broadcast %cst_86 : f32 to vector<8x128xf32>
      %82 = arith.addf %80, %81 : vector<8x128xf32>
      %cst_87 = arith.constant 5.000000e-01 : f32
      %83 = vector.broadcast %cst_87 : f32 to vector<8x128xf32>
      %84 = arith.mulf %83, %82 : vector<8x128xf32>
      %85 = vector.extract_strided_slice %76 {offsets = [0, 128], sizes = [8, 128], strides = [1, 1]} : vector<8x512xf32> to vector<8x128xf32>
      %cst_88 = arith.constant 5.000000e-01 : f32
      %86 = vector.broadcast %cst_88 : f32 to vector<8x128xf32>
      %87 = arith.mulf %86, %85 : vector<8x128xf32>
      %88 = math.tanh %87 : vector<8x128xf32>
      %cst_89 = arith.constant 1.000000e+00 : f32
      %89 = vector.broadcast %cst_89 : f32 to vector<8x128xf32>
      %90 = arith.addf %88, %89 : vector<8x128xf32>
      %cst_90 = arith.constant 5.000000e-01 : f32
      %91 = vector.broadcast %cst_90 : f32 to vector<8x128xf32>
      %92 = arith.mulf %91, %90 : vector<8x128xf32>
      %93 = vector.extract_strided_slice %76 {offsets = [0, 256], sizes = [8, 128], strides = [1, 1]} : vector<8x512xf32> to vector<8x128xf32>
      %94 = math.tanh %93 : vector<8x128xf32>
      %95 = vector.extract_strided_slice %76 {offsets = [0, 384], sizes = [8, 128], strides = [1, 1]} : vector<8x512xf32> to vector<8x128xf32>
      %cst_91 = arith.constant 5.000000e-01 : f32
      %96 = vector.broadcast %cst_91 : f32 to vector<8x128xf32>
      %97 = arith.mulf %96, %95 : vector<8x128xf32>
      %98 = math.tanh %97 : vector<8x128xf32>
      %cst_92 = arith.constant 1.000000e+00 : f32
      %99 = vector.broadcast %cst_92 : f32 to vector<8x128xf32>
      %100 = arith.addf %98, %99 : vector<8x128xf32>
      %cst_93 = arith.constant 5.000000e-01 : f32
      %101 = vector.broadcast %cst_93 : f32 to vector<8x128xf32>
      %102 = arith.mulf %101, %100 : vector<8x128xf32>
      %103 = arith.mulf %92, %arg13 : vector<8x128xf32>
      %104 = arith.mulf %84, %94 : vector<8x128xf32>
      %105 = arith.addf %103, %104 : vector<8x128xf32>
      %106 = math.tanh %105 : vector<8x128xf32>
      %107 = arith.mulf %102, %106 : vector<8x128xf32>
      %108 = arith.index_cast %71 : i32 to index
      %c0_94 = arith.constant 0 : index
      %109 = vector.load %arg7[%108, %c0_94] : memref<64x128xf32, #tpu.memory_space<vmem>>, vector<8x128xf32>
      tpu.vector_store %arg7[%108, %c0_94], %107 {strides = array<i32>} : memref<64x128xf32, #tpu.memory_space<vmem>>, vector<8x128xf32>,
      scf.yield %107, %105 : vector<8x128xf32>, vector<8x128xf32>
    }
    %c8_i32_46 = arith.constant 8 : i32
    %c1_47 = arith.constant 1 : index
    %c0_48 = arith.constant 0 : index
    %c0_49 = arith.constant 0 : index
    %40 = vector.load %arg8[%c1_47, %c0_48, %c0_49] : memref<3x8x128xf32, #tpu.memory_space<vmem>>, vector<1x8x128xf32>
    %41 = vector.shape_cast %40 : vector<1x8x128xf32> to vector<8x128xf32>
    %42 = vector.shape_cast %39#0 : vector<8x128xf32> to vector<1x8x128xf32>
    tpu.vector_store %arg8[%c1_47, %c0_48, %c0_49], %42 {strides = array<i32>} : memref<3x8x128xf32, #tpu.memory_space<vmem>>, vector<1x8x128xf32>,
    %c1_50 = arith.constant 1 : index
    %c0_51 = arith.constant 0 : index
    %c0_52 = arith.constant 0 : index
    %43 = vector.load %arg9[%c1_50, %c0_51, %c0_52] : memref<3x8x128xf32, #tpu.memory_space<vmem>>, vector<1x8x128xf32>
    %44 = vector.shape_cast %43 : vector<1x8x128xf32> to vector<8x128xf32>
    %45 = vector.shape_cast %39#1 : vector<8x128xf32> to vector<1x8x128xf32>
    tpu.vector_store %arg9[%c1_50, %c0_51, %c0_52], %45 {strides = array<i32>} : memref<3x8x128xf32, #tpu.memory_space<vmem>>, vector<1x8x128xf32>,
    %c0_53 = arith.constant 0 : index
    %c0_54 = arith.constant 0 : index
    %46 = vector.load %arg7[%c0_53, %c0_54] : memref<64x128xf32, #tpu.memory_space<vmem>>, vector<64x128xf32>
    %47 = arith.truncf %46 : vector<64x128xf32> to vector<64x128xbf16>
    %c1_55 = arith.constant 1 : index
    %c0_56 = arith.constant 0 : index
    %c0_57 = arith.constant 0 : index
    %48 = vector.load %arg4[%c1_55, %c0_56, %c0_57] : memref<2x128x512xbf16, #tpu.memory_space<vmem>>, vector<1x128x512xbf16>
    %49 = vector.shape_cast %48 : vector<1x128x512xbf16> to vector<128x512xbf16>
    %c2 = arith.constant 2 : index
    %c0_58 = arith.constant 0 : index
    %c0_59 = arith.constant 0 : index
    %50 = vector.load %arg6[%c2, %c0_58, %c0_59] : memref<3x1x512xf32, #tpu.memory_space<vmem>>, vector<1x1x512xf32>
    %51 = vector.shape_cast %50 : vector<1x1x512xf32> to vector<1x512xf32>
    %cst_60 = arith.constant dense<0.000000e+00> : vector<64x512xf32>
    %52 = tpu.matmul %47, %49, %cst_60 {dimension_numbers = #tpu.dot_dimension_numbers<[1], [0], [0], [1], [0, 0, 1, 1], [], []>} : vector<64x128xbf16>, vector<128x512xbf16>, vector<64x512xf32> -> vector<64x512xf32>
    %53 = vector.broadcast %51 : vector<1x512xf32> to vector<64x512xf32>
    %54 = arith.addf %52, %53 : vector<64x512xf32>
    %c0_61 = arith.constant 0 : index
    %c0_62 = arith.constant 0 : index
    %55 = vector.load %arg10[%c0_61, %c0_62] : memref<64x512xf32, #tpu.memory_space<vmem>>, vector<64x512xf32>
    tpu.vector_store %arg10[%c0_61, %c0_62], %54 {strides = array<i32>} : memref<64x512xf32, #tpu.memory_space<vmem>>, vector<64x512xf32>,
    %c2_63 = arith.constant 2 : index
    %c0_64 = arith.constant 0 : index
    %c0_65 = arith.constant 0 : index
    %56 = vector.load %arg5[%c2_63, %c0_64, %c0_65] : memref<3x128x512xbf16, #tpu.memory_space<vmem>>, vector<1x128x512xbf16>
    %57 = vector.shape_cast %56 : vector<1x128x512xbf16> to vector<128x512xbf16>
    %c2_66 = arith.constant 2 : index
    %c0_67 = arith.constant 0 : index
    %c0_68 = arith.constant 0 : index
    %58 = vector.load %arg1[%c2_66, %c0_67, %c0_68] : memref<3x8x128xf32, #tpu.memory_space<vmem>>, vector<1x8x128xf32>
    %59 = vector.shape_cast %58 : vector<1x8x128xf32> to vector<8x128xf32>
    %c2_69 = arith.constant 2 : index
    %c0_70 = arith.constant 0 : index
    %c0_71 = arith.constant 0 : index
    %60 = vector.load %arg2[%c2_69, %c0_70, %c0_71] : memref<3x8x128xf32, #tpu.memory_space<vmem>>, vector<1x8x128xf32>
    %61 = vector.shape_cast %60 : vector<1x8x128xf32> to vector<8x128xf32>
    %c0_i32_72 = arith.constant 0 : i32
    %c8_i32_73 = arith.constant 8 : i32
    %62 = arith.addi %c0_i32_72, %c8_i32_73 : i32
    %c1_i32_74 = arith.constant 1 : i32
    %63:2 = scf.for %arg11 = %c0_i32_72 to %62 step %c1_i32_74 iter_args(%arg12 = %59, %arg13 = %61) -> (vector<8x128xf32>, vector<8x128xf32>)  : i32 {
      %c8_i32_82 = arith.constant 8 : i32
      %70 = arith.muli %arg11, %c8_i32_82 : i32
      %71 = tpu.assume_multiple %70, 8 : i32
      %72 = arith.index_cast %71 : i32 to index
      %c0_83 = arith.constant 0 : index
      %73 = vector.load %arg10[%72, %c0_83] : memref<64x512xf32, #tpu.memory_space<vmem>>, vector<8x512xf32>
      %74 = arith.truncf %arg12 : vector<8x128xf32> to vector<8x128xbf16>
      %cst_84 = arith.constant dense<0.000000e+00> : vector<8x512xf32>
      %75 = tpu.matmul %74, %57, %cst_84 {dimension_numbers = #tpu.dot_dimension_numbers<[1], [0], [0], [1], [0, 0, 1, 1], [], []>} : vector<8x128xbf16>, vector<128x512xbf16>, vector<8x512xf32> -> vector<8x512xf32>
      %76 = arith.addf %73, %75 : vector<8x512xf32>
      %77 = vector.extract_strided_slice %76 {offsets = [0, 0], sizes = [8, 128], strides = [1, 1]} : vector<8x512xf32> to vector<8x128xf32>
      %cst_85 = arith.constant 5.000000e-01 : f32
      %78 = vector.broadcast %cst_85 : f32 to vector<8x128xf32>
      %79 = arith.mulf %78, %77 : vector<8x128xf32>
      %80 = math.tanh %79 : vector<8x128xf32>
      %cst_86 = arith.constant 1.000000e+00 : f32
      %81 = vector.broadcast %cst_86 : f32 to vector<8x128xf32>
      %82 = arith.addf %80, %81 : vector<8x128xf32>
      %cst_87 = arith.constant 5.000000e-01 : f32
      %83 = vector.broadcast %cst_87 : f32 to vector<8x128xf32>
      %84 = arith.mulf %83, %82 : vector<8x128xf32>
      %85 = vector.extract_strided_slice %76 {offsets = [0, 128], sizes = [8, 128], strides = [1, 1]} : vector<8x512xf32> to vector<8x128xf32>
      %cst_88 = arith.constant 5.000000e-01 : f32
      %86 = vector.broadcast %cst_88 : f32 to vector<8x128xf32>
      %87 = arith.mulf %86, %85 : vector<8x128xf32>
      %88 = math.tanh %87 : vector<8x128xf32>
      %cst_89 = arith.constant 1.000000e+00 : f32
      %89 = vector.broadcast %cst_89 : f32 to vector<8x128xf32>
      %90 = arith.addf %88, %89 : vector<8x128xf32>
      %cst_90 = arith.constant 5.000000e-01 : f32
      %91 = vector.broadcast %cst_90 : f32 to vector<8x128xf32>
      %92 = arith.mulf %91, %90 : vector<8x128xf32>
      %93 = vector.extract_strided_slice %76 {offsets = [0, 256], sizes = [8, 128], strides = [1, 1]} : vector<8x512xf32> to vector<8x128xf32>
      %94 = math.tanh %93 : vector<8x128xf32>
      %95 = vector.extract_strided_slice %76 {offsets = [0, 384], sizes = [8, 128], strides = [1, 1]} : vector<8x512xf32> to vector<8x128xf32>
      %cst_91 = arith.constant 5.000000e-01 : f32
      %96 = vector.broadcast %cst_91 : f32 to vector<8x128xf32>
      %97 = arith.mulf %96, %95 : vector<8x128xf32>
      %98 = math.tanh %97 : vector<8x128xf32>
      %cst_92 = arith.constant 1.000000e+00 : f32
      %99 = vector.broadcast %cst_92 : f32 to vector<8x128xf32>
      %100 = arith.addf %98, %99 : vector<8x128xf32>
      %cst_93 = arith.constant 5.000000e-01 : f32
      %101 = vector.broadcast %cst_93 : f32 to vector<8x128xf32>
      %102 = arith.mulf %101, %100 : vector<8x128xf32>
      %103 = arith.mulf %92, %arg13 : vector<8x128xf32>
      %104 = arith.mulf %84, %94 : vector<8x128xf32>
      %105 = arith.addf %103, %104 : vector<8x128xf32>
      %106 = math.tanh %105 : vector<8x128xf32>
      %107 = arith.mulf %102, %106 : vector<8x128xf32>
      %108 = arith.index_cast %71 : i32 to index
      %c0_94 = arith.constant 0 : index
      %109 = vector.load %arg7[%108, %c0_94] : memref<64x128xf32, #tpu.memory_space<vmem>>, vector<8x128xf32>
      tpu.vector_store %arg7[%108, %c0_94], %107 {strides = array<i32>} : memref<64x128xf32, #tpu.memory_space<vmem>>, vector<8x128xf32>,
      scf.yield %107, %105 : vector<8x128xf32>, vector<8x128xf32>
    }
    %c8_i32_75 = arith.constant 8 : i32
    %c2_76 = arith.constant 2 : index
    %c0_77 = arith.constant 0 : index
    %c0_78 = arith.constant 0 : index
    %64 = vector.load %arg8[%c2_76, %c0_77, %c0_78] : memref<3x8x128xf32, #tpu.memory_space<vmem>>, vector<1x8x128xf32>
    %65 = vector.shape_cast %64 : vector<1x8x128xf32> to vector<8x128xf32>
    %66 = vector.shape_cast %63#0 : vector<8x128xf32> to vector<1x8x128xf32>
    tpu.vector_store %arg8[%c2_76, %c0_77, %c0_78], %66 {strides = array<i32>} : memref<3x8x128xf32, #tpu.memory_space<vmem>>, vector<1x8x128xf32>,
    %c2_79 = arith.constant 2 : index
    %c0_80 = arith.constant 0 : index
    %c0_81 = arith.constant 0 : index
    %67 = vector.load %arg9[%c2_79, %c0_80, %c0_81] : memref<3x8x128xf32, #tpu.memory_space<vmem>>, vector<1x8x128xf32>
    %68 = vector.shape_cast %67 : vector<1x8x128xf32> to vector<8x128xf32>
    %69 = vector.shape_cast %63#1 : vector<8x128xf32> to vector<1x8x128xf32>
    tpu.vector_store %arg9[%c2_79, %c0_80, %c0_81], %69 {strides = array<i32>} : memref<3x8x128xf32, #tpu.memory_space<vmem>>, vector<1x8x128xf32>,
    return
  }
}

module attributes {stable_mosaic.version = 11 : i64} {
  func.func @fc_kernel(%arg0: i32, %arg1: memref<8x128xf32, #tpu.memory_space<vmem>>, %arg2: memref<128x128xbf16, #tpu.memory_space<vmem>>, %arg3: memref<1x128xf32, #tpu.memory_space<vmem>>, %arg4: memref<8x128xf32, #tpu.memory_space<vmem>>) attributes {dimension_semantics = [#tpu.dimension_semantics<parallel>], iteration_bounds = array<i64: 2>, scalar_prefetch = 0 : i64, scratch_operands = 0 : i64, tpu.core_type = #tpu.core_type<tc>, window_params = [{transform_indices = @transform_0, window_bounds = array<i64: 8, 128>}, {pipeline_mode = #tpu.pipeline_mode<synchronous>, transform_indices = @transform_1, window_bounds = array<i64: 128, 128>}, {pipeline_mode = #tpu.pipeline_mode<synchronous>, transform_indices = @transform_2, window_bounds = array<i64: 1, 128>}, {transform_indices = @transform_3, window_bounds = array<i64: 8, 128>}]} {
    %c0 = arith.constant 0 : index
    %c0_0 = arith.constant 0 : index
    %0 = vector.load %arg1[%c0, %c0_0] : memref<8x128xf32, #tpu.memory_space<vmem>>, vector<8x128xf32>
    %1 = arith.truncf %0 : vector<8x128xf32> to vector<8x128xbf16>
    %c0_1 = arith.constant 0 : index
    %c0_2 = arith.constant 0 : index
    %2 = vector.load %arg2[%c0_1, %c0_2] : memref<128x128xbf16, #tpu.memory_space<vmem>>, vector<128x128xbf16>
    %cst = arith.constant dense<0.000000e+00> : vector<8x128xf32>
    %3 = tpu.matmul %1, %2, %cst {dimension_numbers = #tpu.dot_dimension_numbers<[1], [0], [0], [1], [0, 0, 1, 1], [], []>} : vector<8x128xbf16>, vector<128x128xbf16>, vector<8x128xf32> -> vector<8x128xf32>
    %c0_3 = arith.constant 0 : index
    %c0_4 = arith.constant 0 : index
    %4 = vector.load %arg3[%c0_3, %c0_4] : memref<1x128xf32, #tpu.memory_space<vmem>>, vector<1x128xf32>
    %5 = vector.broadcast %4 : vector<1x128xf32> to vector<8x128xf32>
    %6 = arith.addf %3, %5 : vector<8x128xf32>
    %c0_5 = arith.constant 0 : index
    %c0_6 = arith.constant 0 : index
    %7 = vector.load %arg4[%c0_5, %c0_6] : memref<8x128xf32, #tpu.memory_space<vmem>>, vector<8x128xf32>
    tpu.vector_store %arg4[%c0_5, %c0_6], %6 {strides = array<i32>} : memref<8x128xf32, #tpu.memory_space<vmem>>, vector<8x128xf32>,
    return
  }
  func.func @transform_0(%arg0: i32) -> (i32, i32) {
    %c0_i32 = arith.constant 0 : i32
    %c0_i32_0 = arith.constant 0 : i32
    return %arg0, %c0_i32 : i32, i32
  }
  func.func @transform_1(%arg0: i32) -> (i32, i32) {
    %c0_i32 = arith.constant 0 : i32
    %c0_i32_0 = arith.constant 0 : i32
    %c0_i32_1 = arith.constant 0 : i32
    return %c0_i32, %c0_i32_0 : i32, i32
  }
  func.func @transform_2(%arg0: i32) -> (i32, i32) {
    %c0_i32 = arith.constant 0 : i32
    %c0_i32_0 = arith.constant 0 : i32
    %c0_i32_1 = arith.constant 0 : i32
    return %c0_i32, %c0_i32_0 : i32, i32
  }
  func.func @transform_3(%arg0: i32) -> (i32, i32) {
    %c0_i32 = arith.constant 0 : i32
    %c0_i32_0 = arith.constant 0 : i32
    return %arg0, %c0_i32 : i32, i32
  }
}

</mosaic_0001>

<llo_original>
// kernel: music_rnn_forward.3
$region0: #{music_rnn_forward.3}
  #allocation0 [shape = 'u32[]', space=smem, size = 0x4, offset = 0x4, fixed_abs, tag = 'smem constant byte address 0x4 - core index']
  #allocation1 [shape = 'u32[72,128]{1,0:T(1,128)}', space=vmem, size = 0x9000, scoped, tag = 'internal scratch']
  %s0 = inlined_call_operand.vmem [shape: f32[16,128], index: 0, kind: input, shape index: {}]
  %s1 = inlined_call_operand.vmem [shape: bf16[128,128], index: 1, kind: input, shape index: {}]
  %s2 = inlined_call_operand.vmem [shape: f32[1,128], index: 2, kind: input, shape index: {}]
  %s3 = inlined_call_operand.hbm [shape: f32[16,128], index: 3, kind: output, shape index: {}]
  %s4 = sld [smem:[#allocation0]]
  $region45: #{music_rnn_forward.3} parent=0
    _
  %s6 = ssub.s32 1, %s4
  %s7 = scalar_select 0, %s6, %s4
  $region1: #{music_rnn_forward.3} parent=0
    #allocation2 [shape = 'u8[8192]{0}', space=vmem, size = 0x2000, scoped, tag = 'output window, operand 0']
    #allocation3 [shape = 's32[2]{0}', space=sflag, size = 0x8, scoped, tag = 'scoped memory for music_rnn_forward.3']
    %8 = vsyncpa [#allocation3], 0
    %s9 = scalar_lea.sflag [#allocation3], 1
    %10 = vsyncpa %s9, 0
    loop: start=0, step=1, limit=4
    $region2: #{music_rnn_forward.3} parent=1 // loop_pre_header
      _
    $region3: #{music_rnn_forward.3} parent=1 // loop_header
      %s12 = sphi 0, %s16
      %p13 = scmp.ge.s32.totalorder %s12, 4
      %s22 = sphi 0, %s24
      %s25 = sphi 0, %s22
      %s26 = sphi 0, %s25
      %s42 = sphi 0, %s26
      %s46 = sphi 0, %s46
      %s48 = sphi 0, %s46
      %s49 = sphi 0, %s48
      %s63 = sphi 0, %s49
      %s67 = sphi 0, %s67
      %s69 = sphi 0, %s67
      %s70 = sphi 0, %s69
      %s84 = sphi 0, %s70
      %s90 = sphi 0, %s92
      %s93 = sphi 0, %s90
      %s94 = sphi 0, %s93
      %s110 = sphi 0, %s94
    $region4: #{music_rnn_forward.3} parent=1 // loop_header_branch
      %15 = sbr.rel (%p13) target = $region8
    $region5: #{music_rnn_forward.3} parent=1 // loop_body
      %s17 = ssub.s32 %s12, 1
      %s18 = ssub.s32 %s12, 2
      %s19 = sadd.s32 %s12, 1
      %s20 = ssub.s32 %s12, %s19
      %p21 = scmp.eq.s32.totalorder %s20, 0
      %s23 = sadd.s32 %s22, 1
      %s24 = scalar_select %p21, %s22, %s23
      %p27 = pneg %p21
      %p28 = scmp.eq.s32.totalorder %s12, 1
      %p29 = por %p27, %p28
      %p30 = scmp.ne.s32.totalorder %s22, %s25
      %p31 = scmp.eq.s32.totalorder %s12, 0
      %p32 = por %p30, %p31
      %p33 = scmp.ne.s32.totalorder %s22, %s25
      %p34 = scmp.eq.s32.totalorder %s17, 1
      %p35 = por %p33, %p34
      %p36 = scmp.ne.s32.totalorder %s25, %s26
      %p37 = scmp.eq.s32.totalorder %s17, 0
      %p38 = por %p36, %p37
      %p39 = scmp.ne.s32.totalorder %s25, %s26
      %p40 = scmp.eq.s32.totalorder %s18, 1
      %p41 = por %p39, %p40
      %p43 = scmp.ne.s32.totalorder %s26, %s42
      %p44 = scmp.eq.s32.totalorder %s18, 0
      %p45 = por %p43, %p44
      %s47 = sadd.s32 %s46, 1
      %p50 = scmp.eq.s32.totalorder %s12, 1
      %p51 = scmp.ne.s32.totalorder %s46, %s48
      %p52 = scmp.eq.s32.totalorder %s12, 0
      %p53 = por %p51, %p52
      %p54 = scmp.ne.s32.totalorder %s46, %s48
      %p55 = scmp.eq.s32.totalorder %s17, 1
      %p56 = por %p54, %p55
      %p57 = scmp.ne.s32.totalorder %s48, %s49
      %p58 = scmp.eq.s32.totalorder %s17, 0
      %p59 = por %p57, %p58
      %p60 = scmp.ne.s32.totalorder %s48, %s49
      %p61 = scmp.eq.s32.totalorder %s18, 1
      %p62 = por %p60, %p61
      %p64 = scmp.ne.s32.totalorder %s49, %s63
      %p65 = scmp.eq.s32.totalorder %s18, 0
      %p66 = por %p64, %p65
      %s68 = sadd.s32 %s67, 1
      %p71 = scmp.eq.s32.totalorder %s12, 1
      %p72 = scmp.ne.s32.totalorder %s67, %s69
      %p73 = scmp.eq.s32.totalorder %s12, 0
      %p74 = por %p72, %p73
      %p75 = scmp.ne.s32.totalorder %s67, %s69
      %p76 = scmp.eq.s32.totalorder %s17, 1
      %p77 = por %p75, %p76
      %p78 = scmp.ne.s32.totalorder %s69, %s70
      %p79 = scmp.eq.s32.totalorder %s17, 0
      %p80 = por %p78, %p79
      %p81 = scmp.ne.s32.totalorder %s69, %s70
      %p82 = scmp.eq.s32.totalorder %s18, 1
      %p83 = por %p81, %p82
      %p85 = scmp.ne.s32.totalorder %s70, %s84
      %p86 = scmp.eq.s32.totalorder %s18, 0
      %p87 = por %p85, %p86
      %s88 = ssub.s32 %s12, %s19
      %p89 = scmp.eq.s32.totalorder %s88, 0
      %s91 = sadd.s32 %s90, 1
      %s92 = scalar_select %p89, %s90, %s91
      %p95 = pneg %p89
      %p96 = scmp.eq.s32.totalorder %s12, 1
      %p97 = por %p95, %p96
      %p98 = scmp.ne.s32.totalorder %s90, %s93
      %p99 = scmp.eq.s32.totalorder %s12, 0
      %p100 = por %p98, %p99
      %p101 = scmp.ne.s32.totalorder %s90, %s93
      %p102 = scmp.eq.s32.totalorder %s17, 1
      %p103 = por %p101, %p102
      %p104 = scmp.ne.s32.totalorder %s93, %s94
      %p105 = scmp.eq.s32.totalorder %s17, 0
      %p106 = por %p104, %p105
      %p107 = scmp.ne.s32.totalorder %s93, %s94
      %p108 = scmp.eq.s32.totalorder %s18, 1
      %p109 = por %p107, %p108
      %p111 = scmp.ne.s32.totalorder %s94, %s110
      %p112 = scmp.eq.s32.totalorder %s18, 0
      %p113 = por %p111, %p112
      %p114 = scmp.le.s32.totalorder 1, %s12
      %p115 = scmp.lt.s32.totalorder %s12, 3
      %p116 = pnand %p114, %p115
      %p117 = pneg %p116
      // Predicated region
      $region9: #{music_rnn_forward.3} parent=5 // pred_check
        _
      $region10: #{music_rnn_forward.3} parent=5 // pred_check_branch
        %119 = sbr.rel (%p116) target = $region12
      $region11: #{music_rnn_forward.3} parent=5 // pred_region
        %s120 = ssub.s32 %s12, 1
        // Predicated region
        $region13: #{music_rnn_forward.3} parent=11 // pred_check
          %p121 = pneg %p59
        $region14: #{music_rnn_forward.3} parent=11 // pred_check_branch
          %123 = sbr.rel (%p121) target = $region16
        $region15: #{music_rnn_forward.3} parent=11 // pred_region
          _
        $region16: #{music_rnn_forward.3} parent=11 // pred_fallthru
          _
        // Predicated region
        $region17: #{music_rnn_forward.3} parent=11 // pred_check
          %p124 = pneg %p80
        $region18: #{music_rnn_forward.3} parent=11 // pred_check_branch
          %126 = sbr.rel (%p124) target = $region20
        $region19: #{music_rnn_forward.3} parent=11 // pred_region
          _
        $region20: #{music_rnn_forward.3} parent=11 // pred_fallthru
          _
      $region12: #{music_rnn_forward.3} parent=5 // pred_fallthru
        _
      %p127 = scmp.lt.s32.totalorder %s12, 2
      // Predicated region
      $region21: #{music_rnn_forward.3} parent=5 // pred_check
        %p128 = pneg %p127
      $region22: #{music_rnn_forward.3} parent=5 // pred_check_branch
        %130 = sbr.rel (%p128) target = $region24
      $region23: #{music_rnn_forward.3} parent=5 // pred_region
        // Predicated region
        $region25: #{music_rnn_forward.3} parent=23 // pred_check
          %p131 = pneg %p32
        $region26: #{music_rnn_forward.3} parent=23 // pred_check_branch
          %133 = sbr.rel (%p131) target = $region28
        $region27: #{music_rnn_forward.3} parent=23 // pred_region
          %p134 = scmp.lt.s32.totalorder %s12, 1
          %s135 = scalar_select %p134, %s12, 1
          %s136 = smul.addr %s135, 8
          %s137 = scalar_lea.vmem %s0, %s136
        $region28: #{music_rnn_forward.3} parent=23 // pred_fallthru
          _
      $region24: #{music_rnn_forward.3} parent=5 // pred_fallthru
        _
      %p138 = scmp.le.s32.totalorder 1, %s12
      %p139 = scmp.lt.s32.totalorder %s12, 3
      %p140 = pnand %p138, %p139
      %p141 = pneg %p140
      // Predicated region
      $region29: #{music_rnn_forward.3} parent=5 // pred_check
        _
      $region30: #{music_rnn_forward.3} parent=5 // pred_check_branch
        %143 = sbr.rel (%p140) target = $region32
      $region31: #{music_rnn_forward.3} parent=5 // pred_region
        %s144 = ssub.s32 %s12, 1
        %p145 = scmp.lt.s32.totalorder %s17, 1
        %s146 = scalar_select %p145, %s17, 1
        %s147 = smul.addr %s146, 8
        %s148 = scalar_lea.vmem %s0, %s147
        %p149 = pneg %p38
        %p150 = pneg %p35
        %p151 = pneg %p59
        %p152 = pneg %p56
        %p153 = pneg %p80
        %p154 = pneg %p77
        %p155 = pneg %p106
        %p156 = pneg %p103
        %s157 = sand.u32 %s93, 1
        %s158 = scalar_lea.sflag [#allocation3], %s157
        %s159 = sand.u32 %s93, 1
        %s160 = smul.addr %s159, 8
        %s161 = scalar_lea.vmem [#allocation2], %s160
        %p162 = scmp.lt.s32.totalorder %s17, 1
        %s163 = scalar_select %p162, %s17, 1
        %s164 = smul.addr %s163, 8
        %s165 = scalar_lea.vmem %s0, %s164
        %v166 = vld [vmem:[%s165] sm:$0xff]
        %v167 = vpack.c.bf16 %v166, %v166
        %v168 = vld [vmem:[%s1] sm:$0xf]
        %v169 = vld [vmem:[%s1 + $0x4] sm:$0xf]
        %v170 = vld [vmem:[%s1 + $0x8] sm:$0xf]
        %v171 = vld [vmem:[%s1 + $0xc] sm:$0xf]
        %v172 = vld [vmem:[%s1 + $0x10] sm:$0xf]
        %v173 = vld [vmem:[%s1 + $0x14] sm:$0xf]
        %v174 = vld [vmem:[%s1 + $0x18] sm:$0xf]
        %v175 = vld [vmem:[%s1 + $0x1c] sm:$0xf]
        %v176 = vld [vmem:[%s1 + $0x20] sm:$0xf]
        %v177 = vld [vmem:[%s1 + $0x24] sm:$0xf]
        %v178 = vld [vmem:[%s1 + $0x28] sm:$0xf]
        %v179 = vld [vmem:[%s1 + $0x2c] sm:$0xf]
        %v180 = vld [vmem:[%s1 + $0x30] sm:$0xf]
        %v181 = vld [vmem:[%s1 + $0x34] sm:$0xf]
        %v182 = vld [vmem:[%s1 + $0x38] sm:$0xf]
        %v183 = vld [vmem:[%s1 + $0x3c] sm:$0xf]
        %v184 = vld [vmem:[%s2] sm:$0x1]
        %v186 = vperm.slane %v184, 0
        %v204 = vunpack.c.l.b16 %v168
        %v205 = vunpack.c.l.b16 %v169
        %v206 = vunpack.c.l.b16 %v170
        %v207 = vunpack.c.l.b16 %v171
        %v208 = vunpack.c.l.b16 %v172
        %v209 = vunpack.c.l.b16 %v173
        %v210 = vunpack.c.l.b16 %v174
        %v211 = vunpack.c.l.b16 %v175
        %v212 = vunpack.c.l.b16 %v176
        %v213 = vunpack.c.l.b16 %v177
        %v214 = vunpack.c.l.b16 %v178
        %v215 = vunpack.c.l.b16 %v179
        %v216 = vunpack.c.l.b16 %v180
        %v217 = vunpack.c.l.b16 %v181
        %v218 = vunpack.c.l.b16 %v182
        %v219 = vunpack.c.l.b16 %v183
        %v220 = vpack.c.b16 %v205, %v204
        %v221 = vpack.c.b16 %v207, %v206
        %v222 = vpack.c.b16 %v209, %v208
        %v223 = vpack.c.b16 %v211, %v210
        %v224 = vpack.c.b16 %v213, %v212
        %v225 = vpack.c.b16 %v215, %v214
        %v226 = vpack.c.b16 %v217, %v216
        %v227 = vpack.c.b16 %v219, %v218
        %236 = vmatpush.bf16.msra.mxu0 %v227
        %237 = vmatpush.bf16.msra.mxu0 %v226
        %238 = vmatpush.bf16.msra.mxu0 %v225
        %239 = vmatpush.bf16.msra.mxu0 %v224
        %240 = vmatpush.bf16.msra.mxu0 %v223
        %241 = vmatpush.bf16.msra.mxu0 %v222
        %242 = vmatpush.bf16.msra.mxu0 %v221
        %243 = vmatpush.bf16.msra.mxu0 %v220
        %244 = vmatmul.bf16.gmra.mxu0 %v167
        %v245 = vpop.f32.mrf.mxu0
        %v246 = vadd.f32 %v186, %v245
        %v247 = vpop.f32.mrf.mxu0
        %248 = vdwg.mxu0
        %249 = vst [vmem:[%s161] sm:$0xff] %v246
        %s250 = sand.u32 %s93, 1
        %s251 = scalar_lea.sflag [#allocation3], %s250
        %s252 = sand.u32 %s93, 1
        %s253 = smul.addr %s252, 8
        %s254 = scalar_lea.vmem [#allocation2], %s253
        // Predicated region
        $region33: #{music_rnn_forward.3} parent=31 // pred_check
          %p255 = pneg %p103
        $region34: #{music_rnn_forward.3} parent=31 // pred_check_branch
          %257 = sbr.rel (%p255) target = $region36
        $region35: #{music_rnn_forward.3} parent=31 // pred_region
          %259 = vsyncadd %s251, 0
          %s260 = smul.addr %s17, 8
          %s261 = scalar_lea.hbm %s3, %s260
          %s263 = sshll.u32 %s254, 4
          %s264 = int_to_ptr.vmem [resolvable:$true] %s263
          %s265 = sshll.u32 %s261, 4
          %s266 = int_to_ptr.hbm [resolvable:$true] %s265
          %268 = dma.vmem_to_hbm [thread:$0]  %s264, 128, %s266, %s251
        $region36: #{music_rnn_forward.3} parent=31 // pred_fallthru
          _
      $region32: #{music_rnn_forward.3} parent=5 // pred_fallthru
        _
      %p269 = scmp.le.s32.totalorder 2, %s12
      // Predicated region
      $region37: #{music_rnn_forward.3} parent=5 // pred_check
        %p270 = pneg %p269
      $region38: #{music_rnn_forward.3} parent=5 // pred_check_branch
        %272 = sbr.rel (%p270) target = $region40
      $region39: #{music_rnn_forward.3} parent=5 // pred_region
        %s273 = ssub.s32 %s12, 2
        // Predicated region
        $region41: #{music_rnn_forward.3} parent=39 // pred_check
          %p274 = pneg %p109
        $region42: #{music_rnn_forward.3} parent=39 // pred_check_branch
          %276 = sbr.rel (%p274) target = $region44
        $region43: #{music_rnn_forward.3} parent=39 // pred_region
          %s277 = sand.u32 %s94, 1
          %s278 = scalar_lea.sflag [#allocation3], %s277
          %s279 = sand.u32 %s94, 1
          %s280 = smul.addr %s279, 8
          %s281 = scalar_lea.vmem [#allocation2], %s280
          %283 = dma.done %s278, 128
        $region44: #{music_rnn_forward.3} parent=39 // pred_fallthru
          _
      $region40: #{music_rnn_forward.3} parent=5 // pred_fallthru
        _
    $region6: #{music_rnn_forward.3} parent=1 // loop_footer
      %s16 = sadd.s32 1, %s12
    $region7: #{music_rnn_forward.3} parent=1 // loop_footer_branch
      %11 = sbr.rel target = $region3
    $region8: #{music_rnn_forward.3} parent=1 // loop_exit
      _
    %284 = vsyncpa [#allocation3], 1
    %s285 = scalar_lea.sflag [#allocation3], 1
    %286 = vsyncpa %s285, 1

// kernel: music_rnn_forward.2
$region0: #{music_rnn_forward.2}
  #allocation0 [shape = 'u32[]', space=smem, size = 0x4, offset = 0x4, fixed_abs, tag = 'smem constant byte address 0x4 - core index']
  #allocation1 [shape = 'u32[72,128]{1,0:T(1,128)}', space=vmem, size = 0x9000, scoped, tag = 'internal scratch']
  #allocation2 [shape = 'f32[64,512]{1,0:T(8,128)}', space=vmem, size = 0x20000, scoped, tag = 'scratch operand']
  %s0 = inlined_call_operand.vmem [shape: bf16[64,128], index: 0, kind: input, shape index: {}]
  %s1 = inlined_call_operand.vmem [shape: f32[3,8,128], index: 1, kind: input, shape index: {}]
  %s2 = inlined_call_operand.vmem [shape: f32[3,8,128], index: 2, kind: input, shape index: {}]
  %s3 = inlined_call_operand.vmem [shape: bf16[128,512], index: 3, kind: input, shape index: {}]
  %s4 = inlined_call_operand.vmem [shape: bf16[2,128,512], index: 4, kind: input, shape index: {}]
  %s5 = inlined_call_operand.vmem [shape: bf16[3,128,512], index: 5, kind: input, shape index: {}]
  %s6 = inlined_call_operand.vmem [shape: f32[3,1,512], index: 6, kind: input, shape index: {}]
  %s7 = inlined_call_operand.vmem [shape: f32[64,128], index: 7, kind: output, shape index: {0}]
  %s8 = inlined_call_operand.vmem [shape: f32[3,8,128], index: 8, kind: output, shape index: {1}]
  %s9 = inlined_call_operand.vmem [shape: f32[3,8,128], index: 9, kind: output, shape index: {2}]
  %10 = xla_tuple %s7, %s8, %s9
  %s11 = sld [smem:[#allocation0]]
  $region75: #{music_rnn_forward.2} parent=0
    _
  %s13 = ssub.s32 1, %s11
  %s14 = scalar_select 0, %s13, %s11
  // Predicated region
  $region2: #{music_rnn_forward.2} parent=0 // pred_check
    _
  $region3: #{music_rnn_forward.2} parent=0 // pred_check_branch
    %16 = sbr.rel (0) target = $region5
  $region4: #{music_rnn_forward.2} parent=0 // pred_region
    _
  $region5: #{music_rnn_forward.2} parent=0 // pred_fallthru
    _
  // Predicated region
  $region6: #{music_rnn_forward.2} parent=0 // pred_check
    _
  $region7: #{music_rnn_forward.2} parent=0 // pred_check_branch
    %18 = sbr.rel (0) target = $region9
  $region8: #{music_rnn_forward.2} parent=0 // pred_region
    _
  $region9: #{music_rnn_forward.2} parent=0 // pred_fallthru
    _
  // Predicated region
  $region10: #{music_rnn_forward.2} parent=0 // pred_check
    _
  $region11: #{music_rnn_forward.2} parent=0 // pred_check_branch
    %20 = sbr.rel (0) target = $region13
  $region12: #{music_rnn_forward.2} parent=0 // pred_region
    _
  $region13: #{music_rnn_forward.2} parent=0 // pred_fallthru
    _
  // Predicated region
  $region14: #{music_rnn_forward.2} parent=0 // pred_check
    _
  $region15: #{music_rnn_forward.2} parent=0 // pred_check_branch
    %22 = sbr.rel (0) target = $region17
  $region16: #{music_rnn_forward.2} parent=0 // pred_region
    _
  $region17: #{music_rnn_forward.2} parent=0 // pred_fallthru
    _
  // Predicated region
  $region18: #{music_rnn_forward.2} parent=0 // pred_check
    _
  $region19: #{music_rnn_forward.2} parent=0 // pred_check_branch
    %24 = sbr.rel (0) target = $region21
  $region20: #{music_rnn_forward.2} parent=0 // pred_region
    _
  $region21: #{music_rnn_forward.2} parent=0 // pred_fallthru
    _
  // Predicated region
  $region22: #{music_rnn_forward.2} parent=0 // pred_check
    _
  $region23: #{music_rnn_forward.2} parent=0 // pred_check_branch
    %26 = sbr.rel (0) target = $region25
  $region24: #{music_rnn_forward.2} parent=0 // pred_region
    _
  $region25: #{music_rnn_forward.2} parent=0 // pred_fallthru
    _
  // Predicated region
  $region26: #{music_rnn_forward.2} parent=0 // pred_check
    _
  $region27: #{music_rnn_forward.2} parent=0 // pred_check_branch
    %28 = sbr.rel (0) target = $region29
  $region28: #{music_rnn_forward.2} parent=0 // pred_region
    _
  $region29: #{music_rnn_forward.2} parent=0 // pred_fallthru
    _
  %v29 = vld [vmem:[%s0] sm:$0xf]
  %v30 = vld [vmem:[%s0 + $0x4] sm:$0xf]
  %v31 = vld [vmem:[%s0 + $0x8] sm:$0xf]
  %v32 = vld [vmem:[%s0 + $0xc] sm:$0xf]
  %v33 = vld [vmem:[%s0 + $0x10] sm:$0xf]
  %v34 = vld [vmem:[%s0 + $0x14] sm:$0xf]
  %v35 = vld [vmem:[%s0 + $0x18] sm:$0xf]
  %v36 = vld [vmem:[%s0 + $0x1c] sm:$0xf]
  %v37 = vld [vmem:[%s3] sm:$0xff]
  %v38 = vld [vmem:[%s3 + $0x8] sm:$0xff]
  %v39 = vld [vmem:[%s3 + $0x10] sm:$0xff]
  %v40 = vld [vmem:[%s3 + $0x18] sm:$0xff]
  %v41 = vld [vmem:[%s3 + $0x20] sm:$0xff]
  %v42 = vld [vmem:[%s3 + $0x28] sm:$0xff]
  %v43 = vld [vmem:[%s3 + $0x30] sm:$0xff]
  %v44 = vld [vmem:[%s3 + $0x38] sm:$0xff]
  %v45 = vld [vmem:[%s3 + $0x40] sm:$0xff]
  %v46 = vld [vmem:[%s3 + $0x48] sm:$0xff]
  %v47 = vld [vmem:[%s3 + $0x50] sm:$0xff]
  %v48 = vld [vmem:[%s3 + $0x58] sm:$0xff]
  %v49 = vld [vmem:[%s3 + $0x60] sm:$0xff]
  %v50 = vld [vmem:[%s3 + $0x68] sm:$0xff]
  %v51 = vld [vmem:[%s3 + $0x70] sm:$0xff]
  %v52 = vld [vmem:[%s3 + $0x78] sm:$0xff]
  %v53 = vld [vmem:[%s3 + $0x80] sm:$0xff]
  %v54 = vld [vmem:[%s3 + $0x88] sm:$0xff]
  %v55 = vld [vmem:[%s3 + $0x90] sm:$0xff]
  %v56 = vld [vmem:[%s3 + $0x98] sm:$0xff]
  %v57 = vld [vmem:[%s3 + $0xa0] sm:$0xff]
  %v58 = vld [vmem:[%s3 + $0xa8] sm:$0xff]
  %v59 = vld [vmem:[%s3 + $0xb0] sm:$0xff]
  %v60 = vld [vmem:[%s3 + $0xb8] sm:$0xff]
  %v61 = vld [vmem:[%s3 + $0xc0] sm:$0xff]
  %v62 = vld [vmem:[%s3 + $0xc8] sm:$0xff]
  %v63 = vld [vmem:[%s3 + $0xd0] sm:$0xff]
  %v64 = vld [vmem:[%s3 + $0xd8] sm:$0xff]
  %v65 = vld [vmem:[%s3 + $0xe0] sm:$0xff]
  %v66 = vld [vmem:[%s3 + $0xe8] sm:$0xff]
  %v67 = vld [vmem:[%s3 + $0xf0] sm:$0xff]
  %v68 = vld [vmem:[%s3 + $0xf8] sm:$0xff]
  %v69 = vld [vmem:[%s6] sm:$0xf]
  %v71 = vperm.slane %v69, 0
  %v72 = vperm.slane %v69, 1
  %v73 = vperm.slane %v69, 2
  %v74 = vperm.slane %v69, 3
  %v87 = vunpack.c.l.b16 %v29
  %v88 = vunpack.c.l.b16 %v30
  %v89 = vunpack.c.l.b16 %v31
  %v90 = vunpack.c.l.b16 %v32
  %v91 = vunpack.c.l.b16 %v33
  %v92 = vunpack.c.l.b16 %v34
  %v93 = vunpack.c.l.b16 %v35
  %v94 = vunpack.c.l.b16 %v36
  %v95 = vpack.c.b16 %v88, %v87
  %v96 = vpack.c.b16 %v90, %v89
  %v97 = vpack.c.b16 %v92, %v91
  %v98 = vpack.c.b16 %v94, %v93
  %v135 = vunpack.c.l.b16 %v37
  %v136 = vunpack.c.h.b16 %v37
  %v137 = vunpack.c.l.b16 %v38
  %v138 = vunpack.c.h.b16 %v38
  %v139 = vunpack.c.l.b16 %v39
  %v140 = vunpack.c.h.b16 %v39
  %v141 = vunpack.c.l.b16 %v40
  %v142 = vunpack.c.h.b16 %v40
  %v143 = vunpack.c.l.b16 %v41
  %v144 = vunpack.c.h.b16 %v41
  %v145 = vunpack.c.l.b16 %v42
  %v146 = vunpack.c.h.b16 %v42
  %v147 = vunpack.c.l.b16 %v43
  %v148 = vunpack.c.h.b16 %v43
  %v149 = vunpack.c.l.b16 %v44
  %v150 = vunpack.c.h.b16 %v44
  %v151 = vunpack.c.l.b16 %v45
  %v152 = vunpack.c.h.b16 %v45
  %v153 = vunpack.c.l.b16 %v46
  %v154 = vunpack.c.h.b16 %v46
  %v155 = vunpack.c.l.b16 %v47
  %v156 = vunpack.c.h.b16 %v47
  %v157 = vunpack.c.l.b16 %v48
  %v158 = vunpack.c.h.b16 %v48
  %v159 = vunpack.c.l.b16 %v49
  %v160 = vunpack.c.h.b16 %v49
  %v161 = vunpack.c.l.b16 %v50
  %v162 = vunpack.c.h.b16 %v50
  %v163 = vunpack.c.l.b16 %v51
  %v164 = vunpack.c.h.b16 %v51
  %v165 = vunpack.c.l.b16 %v52
  %v166 = vunpack.c.h.b16 %v52
  %v167 = vunpack.c.l.b16 %v53
  %v168 = vunpack.c.h.b16 %v53
  %v169 = vunpack.c.l.b16 %v54
  %v170 = vunpack.c.h.b16 %v54
  %v171 = vunpack.c.l.b16 %v55
  %v172 = vunpack.c.h.b16 %v55
  %v173 = vunpack.c.l.b16 %v56
  %v174 = vunpack.c.h.b16 %v56
  %v175 = vunpack.c.l.b16 %v57
  %v176 = vunpack.c.h.b16 %v57
  %v177 = vunpack.c.l.b16 %v58
  %v178 = vunpack.c.h.b16 %v58
  %v179 = vunpack.c.l.b16 %v59
  %v180 = vunpack.c.h.b16 %v59
  %v181 = vunpack.c.l.b16 %v60
  %v182 = vunpack.c.h.b16 %v60
  %v183 = vunpack.c.l.b16 %v61
  %v184 = vunpack.c.h.b16 %v61
  %v185 = vunpack.c.l.b16 %v62
  %v186 = vunpack.c.h.b16 %v62
  %v187 = vunpack.c.l.b16 %v63
  %v188 = vunpack.c.h.b16 %v63
  %v189 = vunpack.c.l.b16 %v64
  %v190 = vunpack.c.h.b16 %v64
  %v191 = vunpack.c.l.b16 %v65
  %v192 = vunpack.c.h.b16 %v65
  %v193 = vunpack.c.l.b16 %v66
  %v194 = vunpack.c.h.b16 %v66
  %v195 = vunpack.c.l.b16 %v67
  %v196 = vunpack.c.h.b16 %v67
  %v197 = vunpack.c.l.b16 %v68
  %v198 = vunpack.c.h.b16 %v68
  %v199 = vpack.c.b16 %v139, %v135
  %v200 = vpack.c.b16 %v140, %v136
  %v201 = vpack.c.b16 %v141, %v137
  %v202 = vpack.c.b16 %v142, %v138
  %v203 = vpack.c.b16 %v147, %v143
  %v204 = vpack.c.b16 %v148, %v144
  %v205 = vpack.c.b16 %v149, %v145
  %v206 = vpack.c.b16 %v150, %v146
  %v207 = vpack.c.b16 %v155, %v151
  %v208 = vpack.c.b16 %v156, %v152
  %v209 = vpack.c.b16 %v157, %v153
  %v210 = vpack.c.b16 %v158, %v154
  %v211 = vpack.c.b16 %v163, %v159
  %v212 = vpack.c.b16 %v164, %v160
  %v213 = vpack.c.b16 %v165, %v161
  %v214 = vpack.c.b16 %v166, %v162
  %v215 = vpack.c.b16 %v171, %v167
  %v216 = vpack.c.b16 %v172, %v168
  %v217 = vpack.c.b16 %v173, %v169
  %v218 = vpack.c.b16 %v174, %v170
  %v219 = vpack.c.b16 %v179, %v175
  %v220 = vpack.c.b16 %v180, %v176
  %v221 = vpack.c.b16 %v181, %v177
  %v222 = vpack.c.b16 %v182, %v178
  %v223 = vpack.c.b16 %v187, %v183
  %v224 = vpack.c.b16 %v188, %v184
  %v225 = vpack.c.b16 %v189, %v185
  %v226 = vpack.c.b16 %v190, %v186
  %v227 = vpack.c.b16 %v195, %v191
  %v228 = vpack.c.b16 %v196, %v192
  %v229 = vpack.c.b16 %v197, %v193
  %v230 = vpack.c.b16 %v198, %v194
  %263 = vmatpush.bf16.msra.mxu0 %v227
  %264 = vmatpush.bf16.msra.mxu0 %v223
  %265 = vmatpush.bf16.msra.mxu0 %v219
  %266 = vmatpush.bf16.msra.mxu0 %v215
  %267 = vmatpush.bf16.msra.mxu0 %v211
  %268 = vmatpush.bf16.msra.mxu0 %v207
  %269 = vmatpush.bf16.msra.mxu0 %v203
  %270 = vmatpush.bf16.msra.mxu0 %v199
  %271 = vmatmul.bf16.gmra.mxu0 %v95
  %v272 = vpop.f32.mrf.mxu0
  %v273 = vadd.f32 %v71, %v272
  %v274 = vpop.f32.mrf.mxu0
  %v275 = vadd.f32 %v71, %v274
  %276 = vmatmul.bf16.gmra.mxu0 %v96
  %v277 = vpop.f32.mrf.mxu0
  %v278 = vadd.f32 %v71, %v277
  %v279 = vpop.f32.mrf.mxu0
  %v280 = vadd.f32 %v71, %v279
  %281 = vmatmul.bf16.gmra.mxu0 %v97
  %v282 = vpop.f32.mrf.mxu0
  %v283 = vadd.f32 %v71, %v282
  %v284 = vpop.f32.mrf.mxu0
  %v285 = vadd.f32 %v71, %v284
  %286 = vmatmul.bf16.gmra.mxu0 %v98
  %v287 = vpop.f32.mrf.mxu0
  %v288 = vadd.f32 %v71, %v287
  %v289 = vpop.f32.mrf.mxu0
  %v290 = vadd.f32 %v71, %v289
  %291 = vdwg.mxu0
  %292 = vmatpush.bf16.msra.mxu0 %v228
  %293 = vmatpush.bf16.msra.mxu0 %v224
  %294 = vmatpush.bf16.msra.mxu0 %v220
  %295 = vmatpush.bf16.msra.mxu0 %v216
  %296 = vmatpush.bf16.msra.mxu0 %v212
  %297 = vmatpush.bf16.msra.mxu0 %v208
  %298 = vmatpush.bf16.msra.mxu0 %v204
  %299 = vmatpush.bf16.msra.mxu0 %v200
  %300 = vmatmul.bf16.gmra.mxu0 %v95
  %v301 = vpop.f32.mrf.mxu0
  %v302 = vadd.f32 %v72, %v301
  %v303 = vpop.f32.mrf.mxu0
  %v304 = vadd.f32 %v72, %v303
  %305 = vmatmul.bf16.gmra.mxu0 %v96
  %v306 = vpop.f32.mrf.mxu0
  %v307 = vadd.f32 %v72, %v306
  %v308 = vpop.f32.mrf.mxu0
  %v309 = vadd.f32 %v72, %v308
  %310 = vmatmul.bf16.gmra.mxu0 %v97
  %v311 = vpop.f32.mrf.mxu0
  %v312 = vadd.f32 %v72, %v311
  %v313 = vpop.f32.mrf.mxu0
  %v314 = vadd.f32 %v72, %v313
  %315 = vmatmul.bf16.gmra.mxu0 %v98
  %v316 = vpop.f32.mrf.mxu0
  %v317 = vadd.f32 %v72, %v316
  %v318 = vpop.f32.mrf.mxu0
  %v319 = vadd.f32 %v72, %v318
  %320 = vdwg.mxu0
  %321 = vmatpush.bf16.msra.mxu0 %v229
  %322 = vmatpush.bf16.msra.mxu0 %v225
  %323 = vmatpush.bf16.msra.mxu0 %v221
  %324 = vmatpush.bf16.msra.mxu0 %v217
  %325 = vmatpush.bf16.msra.mxu0 %v213
  %326 = vmatpush.bf16.msra.mxu0 %v209
  %327 = vmatpush.bf16.msra.mxu0 %v205
  %328 = vmatpush.bf16.msra.mxu0 %v201
  %329 = vmatmul.bf16.gmra.mxu0 %v95
  %v330 = vpop.f32.mrf.mxu0
  %v331 = vadd.f32 %v73, %v330
  %v332 = vpop.f32.mrf.mxu0
  %v333 = vadd.f32 %v73, %v332
  %334 = vmatmul.bf16.gmra.mxu0 %v96
  %v335 = vpop.f32.mrf.mxu0
  %v336 = vadd.f32 %v73, %v335
  %v337 = vpop.f32.mrf.mxu0
  %v338 = vadd.f32 %v73, %v337
  %339 = vmatmul.bf16.gmra.mxu0 %v97
  %v340 = vpop.f32.mrf.mxu0
  %v341 = vadd.f32 %v73, %v340
  %v342 = vpop.f32.mrf.mxu0
  %v343 = vadd.f32 %v73, %v342
  %344 = vmatmul.bf16.gmra.mxu0 %v98
  %v345 = vpop.f32.mrf.mxu0
  %v346 = vadd.f32 %v73, %v345
  %v347 = vpop.f32.mrf.mxu0
  %v348 = vadd.f32 %v73, %v347
  %349 = vdwg.mxu0
  %350 = vmatpush.bf16.msra.mxu0 %v230
  %351 = vmatpush.bf16.msra.mxu0 %v226
  %352 = vmatpush.bf16.msra.mxu0 %v222
  %353 = vmatpush.bf16.msra.mxu0 %v218
  %354 = vmatpush.bf16.msra.mxu0 %v214
  %355 = vmatpush.bf16.msra.mxu0 %v210
  %356 = vmatpush.bf16.msra.mxu0 %v206
  %357 = vmatpush.bf16.msra.mxu0 %v202
  %358 = vmatmul.bf16.gmra.mxu0 %v95
  %v359 = vpop.f32.mrf.mxu0
  %v360 = vadd.f32 %v74, %v359
  %v361 = vpop.f32.mrf.mxu0
  %v362 = vadd.f32 %v74, %v361
  %363 = vmatmul.bf16.gmra.mxu0 %v96
  %v364 = vpop.f32.mrf.mxu0
  %v365 = vadd.f32 %v74, %v364
  %v366 = vpop.f32.mrf.mxu0
  %v367 = vadd.f32 %v74, %v366
  %368 = vmatmul.bf16.gmra.mxu0 %v97
  %v369 = vpop.f32.mrf.mxu0
  %v370 = vadd.f32 %v74, %v369
  %v371 = vpop.f32.mrf.mxu0
  %v372 = vadd.f32 %v74, %v371
  %373 = vmatmul.bf16.gmra.mxu0 %v98
  %v374 = vpop.f32.mrf.mxu0
  %v375 = vadd.f32 %v74, %v374
  %v376 = vpop.f32.mrf.mxu0
  %v377 = vadd.f32 %v74, %v376
  %378 = vdwg.mxu0
  %379 = vst [vmem:[#allocation2] sm:$0xff] %v273
  %380 = vst [vmem:[#allocation2 + $0x8] sm:$0xff] %v302
  %381 = vst [vmem:[#allocation2 + $0x10] sm:$0xff] %v331
  %382 = vst [vmem:[#allocation2 + $0x18] sm:$0xff] %v360
  %383 = vst [vmem:[#allocation2 + $0x20] sm:$0xff] %v275
  %384 = vst [vmem:[#allocation2 + $0x28] sm:$0xff] %v304
  %385 = vst [vmem:[#allocation2 + $0x30] sm:$0xff] %v333
  %386 = vst [vmem:[#allocation2 + $0x38] sm:$0xff] %v362
  %387 = vst [vmem:[#allocation2 + $0x40] sm:$0xff] %v278
  %388 = vst [vmem:[#allocation2 + $0x48] sm:$0xff] %v307
  %389 = vst [vmem:[#allocation2 + $0x50] sm:$0xff] %v336
  %390 = vst [vmem:[#allocation2 + $0x58] sm:$0xff] %v365
  %391 = vst [vmem:[#allocation2 + $0x60] sm:$0xff] %v280
  %392 = vst [vmem:[#allocation2 + $0x68] sm:$0xff] %v309
  %393 = vst [vmem:[#allocation2 + $0x70] sm:$0xff] %v338
  %394 = vst [vmem:[#allocation2 + $0x78] sm:$0xff] %v367
  %395 = vst [vmem:[#allocation2 + $0x80] sm:$0xff] %v283
  %396 = vst [vmem:[#allocation2 + $0x88] sm:$0xff] %v312
  %397 = vst [vmem:[#allocation2 + $0x90] sm:$0xff] %v341
  %398 = vst [vmem:[#allocation2 + $0x98] sm:$0xff] %v370
  %399 = vst [vmem:[#allocation2 + $0xa0] sm:$0xff] %v285
  %400 = vst [vmem:[#allocation2 + $0xa8] sm:$0xff] %v314
  %401 = vst [vmem:[#allocation2 + $0xb0] sm:$0xff] %v343
  %402 = vst [vmem:[#allocation2 + $0xb8] sm:$0xff] %v372
  %403 = vst [vmem:[#allocation2 + $0xc0] sm:$0xff] %v288
  %404 = vst [vmem:[#allocation2 + $0xc8] sm:$0xff] %v317
  %405 = vst [vmem:[#allocation2 + $0xd0] sm:$0xff] %v346
  %406 = vst [vmem:[#allocation2 + $0xd8] sm:$0xff] %v375
  %407 = vst [vmem:[#allocation2 + $0xe0] sm:$0xff] %v290
  %408 = vst [vmem:[#allocation2 + $0xe8] sm:$0xff] %v319
  %409 = vst [vmem:[#allocation2 + $0xf0] sm:$0xff] %v348
  %410 = vst [vmem:[#allocation2 + $0xf8] sm:$0xff] %v377
  %v411 = vld [vmem:[%s5] sm:$0xff]
  %v412 = vld [vmem:[%s5 + $0x8] sm:$0xff]
  %v413 = vld [vmem:[%s5 + $0x10] sm:$0xff]
  %v414 = vld [vmem:[%s5 + $0x18] sm:$0xff]
  %v415 = vld [vmem:[%s5 + $0x20] sm:$0xff]
  %v416 = vld [vmem:[%s5 + $0x28] sm:$0xff]
  %v417 = vld [vmem:[%s5 + $0x30] sm:$0xff]
  %v418 = vld [vmem:[%s5 + $0x38] sm:$0xff]
  %v419 = vld [vmem:[%s5 + $0x40] sm:$0xff]
  %v420 = vld [vmem:[%s5 + $0x48] sm:$0xff]
  %v421 = vld [vmem:[%s5 + $0x50] sm:$0xff]
  %v422 = vld [vmem:[%s5 + $0x58] sm:$0xff]
  %v423 = vld [vmem:[%s5 + $0x60] sm:$0xff]
  %v424 = vld [vmem:[%s5 + $0x68] sm:$0xff]
  %v425 = vld [vmem:[%s5 + $0x70] sm:$0xff]
  %v426 = vld [vmem:[%s5 + $0x78] sm:$0xff]
  %v427 = vld [vmem:[%s5 + $0x80] sm:$0xff]
  %v428 = vld [vmem:[%s5 + $0x88] sm:$0xff]
  %v429 = vld [vmem:[%s5 + $0x90] sm:$0xff]
  %v430 = vld [vmem:[%s5 + $0x98] sm:$0xff]
  %v431 = vld [vmem:[%s5 + $0xa0] sm:$0xff]
  %v432 = vld [vmem:[%s5 + $0xa8] sm:$0xff]
  %v433 = vld [vmem:[%s5 + $0xb0] sm:$0xff]
  %v434 = vld [vmem:[%s5 + $0xb8] sm:$0xff]
  %v435 = vld [vmem:[%s5 + $0xc0] sm:$0xff]
  %v436 = vld [vmem:[%s5 + $0xc8] sm:$0xff]
  %v437 = vld [vmem:[%s5 + $0xd0] sm:$0xff]
  %v438 = vld [vmem:[%s5 + $0xd8] sm:$0xff]
  %v439 = vld [vmem:[%s5 + $0xe0] sm:$0xff]
  %v440 = vld [vmem:[%s5 + $0xe8] sm:$0xff]
  %v441 = vld [vmem:[%s5 + $0xf0] sm:$0xff]
  %v442 = vld [vmem:[%s5 + $0xf8] sm:$0xff]
  %v443 = vld [vmem:[%s1] sm:$0xff]
  %v444 = vld [vmem:[%s2] sm:$0xff]
  loop: start=0, step=1, limit=8
  $region30: #{music_rnn_forward.2} parent=0 // loop_pre_header
    _
  $region31: #{music_rnn_forward.2} parent=0 // loop_header
    %s446 = sphi 0, %s450
    %p447 = scmp.ge.s32.totalorder %s446, 8
    %v451 = vphi %v443, %v697
    %v452 = vphi %v444, %v695
  $region32: #{music_rnn_forward.2} parent=0 // loop_header_branch
    %449 = sbr.rel (%p447) target = $region36
  $region33: #{music_rnn_forward.2} parent=0 // loop_body
    %s453 = smul.u32 %s446, 8
    %s454 = sshra.s32 %s453, 3
    %s455 = sand.u32 %s453, 7
    %s456 = smul.u32 %s454, 4
    %s457 = smul.addr %s456, 8
    %s458 = scalar_lea.vmem [#allocation2], %s457
    %v459 = vld [vmem:[%s458] sm:$0xff]
    %v460 = vld [vmem:[%s458 + $0x8] sm:$0xff]
    %v461 = vld [vmem:[%s458 + $0x10] sm:$0xff]
    %v462 = vld [vmem:[%s458 + $0x18] sm:$0xff]
    %v463 = vpack.c.bf16 %v451, %v451
    %v496 = vunpack.c.l.b16 %v411
    %v497 = vunpack.c.h.b16 %v411
    %v498 = vunpack.c.l.b16 %v412
    %v499 = vunpack.c.h.b16 %v412
    %v500 = vunpack.c.l.b16 %v413
    %v501 = vunpack.c.h.b16 %v413
    %v502 = vunpack.c.l.b16 %v414
    %v503 = vunpack.c.h.b16 %v414
    %v504 = vunpack.c.l.b16 %v415
    %v505 = vunpack.c.h.b16 %v415
    %v506 = vunpack.c.l.b16 %v416
    %v507 = vunpack.c.h.b16 %v416
    %v508 = vunpack.c.l.b16 %v417
    %v509 = vunpack.c.h.b16 %v417
    %v510 = vunpack.c.l.b16 %v418
    %v511 = vunpack.c.h.b16 %v418
    %v512 = vunpack.c.l.b16 %v419
    %v513 = vunpack.c.h.b16 %v419
    %v514 = vunpack.c.l.b16 %v420
    %v515 = vunpack.c.h.b16 %v420
    %v516 = vunpack.c.l.b16 %v421
    %v517 = vunpack.c.h.b16 %v421
    %v518 = vunpack.c.l.b16 %v422
    %v519 = vunpack.c.h.b16 %v422
    %v520 = vunpack.c.l.b16 %v423
    %v521 = vunpack.c.h.b16 %v423
    %v522 = vunpack.c.l.b16 %v424
    %v523 = vunpack.c.h.b16 %v424
    %v524 = vunpack.c.l.b16 %v425
    %v525 = vunpack.c.h.b16 %v425
    %v526 = vunpack.c.l.b16 %v426
    %v527 = vunpack.c.h.b16 %v426
    %v528 = vunpack.c.l.b16 %v427
    %v529 = vunpack.c.h.b16 %v427
    %v530 = vunpack.c.l.b16 %v428
    %v531 = vunpack.c.h.b16 %v428
    %v532 = vunpack.c.l.b16 %v429
    %v533 = vunpack.c.h.b16 %v429
    %v534 = vunpack.c.l.b16 %v430
    %v535 = vunpack.c.h.b16 %v430
    %v536 = vunpack.c.l.b16 %v431
    %v537 = vunpack.c.h.b16 %v431
    %v538 = vunpack.c.l.b16 %v432
    %v539 = vunpack.c.h.b16 %v432
    %v540 = vunpack.c.l.b16 %v433
    %v541 = vunpack.c.h.b16 %v433
    %v542 = vunpack.c.l.b16 %v434
    %v543 = vunpack.c.h.b16 %v434
    %v544 = vunpack.c.l.b16 %v435
    %v545 = vunpack.c.h.b16 %v435
    %v546 = vunpack.c.l.b16 %v436
    %v547 = vunpack.c.h.b16 %v436
    %v548 = vunpack.c.l.b16 %v437
    %v549 = vunpack.c.h.b16 %v437
    %v550 = vunpack.c.l.b16 %v438
    %v551 = vunpack.c.h.b16 %v438
    %v552 = vunpack.c.l.b16 %v439
    %v553 = vunpack.c.h.b16 %v439
    %v554 = vunpack.c.l.b16 %v440
    %v555 = vunpack.c.h.b16 %v440
    %v556 = vunpack.c.l.b16 %v441
    %v557 = vunpack.c.h.b16 %v441
    %v558 = vunpack.c.l.b16 %v442
    %v559 = vunpack.c.h.b16 %v442
    %v560 = vpack.c.b16 %v500, %v496
    %v561 = vpack.c.b16 %v501, %v497
    %v562 = vpack.c.b16 %v502, %v498
    %v563 = vpack.c.b16 %v503, %v499
    %v564 = vpack.c.b16 %v508, %v504
    %v565 = vpack.c.b16 %v509, %v505
    %v566 = vpack.c.b16 %v510, %v506
    %v567 = vpack.c.b16 %v511, %v507
    %v568 = vpack.c.b16 %v516, %v512
    %v569 = vpack.c.b16 %v517, %v513
    %v570 = vpack.c.b16 %v518, %v514
    %v571 = vpack.c.b16 %v519, %v515
    %v572 = vpack.c.b16 %v524, %v520
    %v573 = vpack.c.b16 %v525, %v521
    %v574 = vpack.c.b16 %v526, %v522
    %v575 = vpack.c.b16 %v527, %v523
    %v576 = vpack.c.b16 %v532, %v528
    %v577 = vpack.c.b16 %v533, %v529
    %v578 = vpack.c.b16 %v534, %v530
    %v579 = vpack.c.b16 %v535, %v531
    %v580 = vpack.c.b16 %v540, %v536
    %v581 = vpack.c.b16 %v541, %v537
    %v582 = vpack.c.b16 %v542, %v538
    %v583 = vpack.c.b16 %v543, %v539
    %v584 = vpack.c.b16 %v548, %v544
    %v585 = vpack.c.b16 %v549, %v545
    %v586 = vpack.c.b16 %v550, %v546
    %v587 = vpack.c.b16 %v551, %v547
    %v588 = vpack.c.b16 %v556, %v552
    %v589 = vpack.c.b16 %v557, %v553
    %v590 = vpack.c.b16 %v558, %v554
    %v591 = vpack.c.b16 %v559, %v555
    %624 = vmatpush.bf16.msra.mxu0 %v588
    %625 = vmatpush.bf16.msra.mxu0 %v584
    %626 = vmatpush.bf16.msra.mxu0 %v580
    %627 = vmatpush.bf16.msra.mxu0 %v576
    %628 = vmatpush.bf16.msra.mxu0 %v572
    %629 = vmatpush.bf16.msra.mxu0 %v568
    %630 = vmatpush.bf16.msra.mxu0 %v564
    %631 = vmatpush.bf16.msra.mxu0 %v560
    %632 = vmatmul.bf16.gmra.mxu0 %v463
    %v633 = vpop.f32.mrf.mxu0
    %v634 = vadd.f32 0.0, %v633
    %v635 = vpop.f32.mrf.mxu0
    %636 = vdwg.mxu0
    %637 = vmatpush.bf16.msra.mxu0 %v589
    %638 = vmatpush.bf16.msra.mxu0 %v585
    %639 = vmatpush.bf16.msra.mxu0 %v581
    %640 = vmatpush.bf16.msra.mxu0 %v577
    %641 = vmatpush.bf16.msra.mxu0 %v573
    %642 = vmatpush.bf16.msra.mxu0 %v569
    %643 = vmatpush.bf16.msra.mxu0 %v565
    %644 = vmatpush.bf16.msra.mxu0 %v561
    %645 = vmatmul.bf16.gmra.mxu0 %v463
    %v646 = vpop.f32.mrf.mxu0
    %v647 = vadd.f32 0.0, %v646
    %v648 = vpop.f32.mrf.mxu0
    %649 = vdwg.mxu0
    %650 = vmatpush.bf16.msra.mxu0 %v590
    %651 = vmatpush.bf16.msra.mxu0 %v586
    %652 = vmatpush.bf16.msra.mxu0 %v582
    %653 = vmatpush.bf16.msra.mxu0 %v578
    %654 = vmatpush.bf16.msra.mxu0 %v574
    %655 = vmatpush.bf16.msra.mxu0 %v570
    %656 = vmatpush.bf16.msra.mxu0 %v566
    %657 = vmatpush.bf16.msra.mxu0 %v562
    %658 = vmatmul.bf16.gmra.mxu0 %v463
    %v659 = vpop.f32.mrf.mxu0
    %v660 = vadd.f32 0.0, %v659
    %v661 = vpop.f32.mrf.mxu0
    %662 = vdwg.mxu0
    %663 = vmatpush.bf16.msra.mxu0 %v591
    %664 = vmatpush.bf16.msra.mxu0 %v587
    %665 = vmatpush.bf16.msra.mxu0 %v583
    %666 = vmatpush.bf16.msra.mxu0 %v579
    %667 = vmatpush.bf16.msra.mxu0 %v575
    %668 = vmatpush.bf16.msra.mxu0 %v571
    %669 = vmatpush.bf16.msra.mxu0 %v567
    %670 = vmatpush.bf16.msra.mxu0 %v563
    %671 = vmatmul.bf16.gmra.mxu0 %v463
    %v672 = vpop.f32.mrf.mxu0
    %v673 = vadd.f32 0.0, %v672
    %v674 = vpop.f32.mrf.mxu0
    %675 = vdwg.mxu0
    %v676 = vadd.f32 %v459, %v634
    %v677 = vadd.f32 %v460, %v647
    %v678 = vadd.f32 %v461, %v660
    %v679 = vadd.f32 %v462, %v673
    %v680 = vmul.f32 %v676, 0.5
    %v681 = vtanh.pop %v680
    %v682 = vadd.f32 %v681, 1.0
    %v683 = vmul.f32 %v682, 0.5
    %v684 = vmul.f32 %v677, 0.5
    %v685 = vtanh.pop %v684
    %v686 = vadd.f32 %v685, 1.0
    %v687 = vmul.f32 %v686, 0.5
    %v688 = vtanh.pop %v678
    %v689 = vmul.f32 %v679, 0.5
    %v690 = vtanh.pop %v689
    %v691 = vadd.f32 %v690, 1.0
    %v692 = vmul.f32 %v691, 0.5
    %v693 = vmul.f32 %v687, %v452
    %v694 = vmul.f32 %v683, %v688
    %v695 = vadd.f32 %v693, %v694
    %v696 = vtanh.pop %v695
    %v697 = vmul.f32 %v692, %v696
    %s698 = scalar_lea.vmem %s7, %s453
    %699 = vst [vmem:[%s698] sm:$0xff] %v697
  $region34: #{music_rnn_forward.2} parent=0 // loop_footer
    %s450 = sadd.s32 1, %s446
  $region35: #{music_rnn_forward.2} parent=0 // loop_footer_branch
    %445 = sbr.rel target = $region31
  $region36: #{music_rnn_forward.2} parent=0 // loop_exit
    _
  %700 = vst [vmem:[%s8] sm:$0xff] %v451
  %701 = vst [vmem:[%s9] sm:$0xff] %v452
  %v702 = vld [vmem:[%s7] sm:$0xff]
  %v703 = vld [vmem:[%s7 + $0x8] sm:$0xff]
  %v704 = vld [vmem:[%s7 + $0x10] sm:$0xff]
  %v705 = vld [vmem:[%s7 + $0x18] sm:$0xff]
  %v706 = vld [vmem:[%s7 + $0x20] sm:$0xff]
  %v707 = vld [vmem:[%s7 + $0x28] sm:$0xff]
  %v708 = vld [vmem:[%s7 + $0x30] sm:$0xff]
  %v709 = vld [vmem:[%s7 + $0x38] sm:$0xff]
  %v710 = vpack.c.bf16 %v703, %v702
  %v711 = vpack.c.bf16 %v705, %v704
  %v712 = vpack.c.bf16 %v707, %v706
  %v713 = vpack.c.bf16 %v709, %v708
  %v714 = vld [vmem:[%s4] sm:$0xff]
  %v715 = vld [vmem:[%s4 + $0x8] sm:$0xff]
  %v716 = vld [vmem:[%s4 + $0x10] sm:$0xff]
  %v717 = vld [vmem:[%s4 + $0x18] sm:$0xff]
  %v718 = vld [vmem:[%s4 + $0x20] sm:$0xff]
  %v719 = vld [vmem:[%s4 + $0x28] sm:$0xff]
  %v720 = vld [vmem:[%s4 + $0x30] sm:$0xff]
  %v721 = vld [vmem:[%s4 + $0x38] sm:$0xff]
  %v722 = vld [vmem:[%s4 + $0x40] sm:$0xff]
  %v723 = vld [vmem:[%s4 + $0x48] sm:$0xff]
  %v724 = vld [vmem:[%s4 + $0x50] sm:$0xff]
  %v725 = vld [vmem:[%s4 + $0x58] sm:$0xff]
  %v726 = vld [vmem:[%s4 + $0x60] sm:$0xff]
  %v727 = vld [vmem:[%s4 + $0x68] sm:$0xff]
  %v728 = vld [vmem:[%s4 + $0x70] sm:$0xff]
  %v729 = vld [vmem:[%s4 + $0x78] sm:$0xff]
  %v730 = vld [vmem:[%s4 + $0x80] sm:$0xff]
  %v731 = vld [vmem:[%s4 + $0x88] sm:$0xff]
  %v732 = vld [vmem:[%s4 + $0x90] sm:$0xff]
  %v733 = vld [vmem:[%s4 + $0x98] sm:$0xff]
  %v734 = vld [vmem:[%s4 + $0xa0] sm:$0xff]
  %v735 = vld [vmem:[%s4 + $0xa8] sm:$0xff]
  %v736 = vld [vmem:[%s4 + $0xb0] sm:$0xff]
  %v737 = vld [vmem:[%s4 + $0xb8] sm:$0xff]
  %v738 = vld [vmem:[%s4 + $0xc0] sm:$0xff]
  %v739 = vld [vmem:[%s4 + $0xc8] sm:$0xff]
  %v740 = vld [vmem:[%s4 + $0xd0] sm:$0xff]
  %v741 = vld [vmem:[%s4 + $0xd8] sm:$0xff]
  %v742 = vld [vmem:[%s4 + $0xe0] sm:$0xff]
  %v743 = vld [vmem:[%s4 + $0xe8] sm:$0xff]
  %v744 = vld [vmem:[%s4 + $0xf0] sm:$0xff]
  %v745 = vld [vmem:[%s4 + $0xf8] sm:$0xff]
  %s746 = scalar_lea.vmem %s6, 4
  %v747 = vld [vmem:[%s746] sm:$0xf]
  %v749 = vperm.slane %v747, 0
  %v750 = vperm.slane %v747, 1
  %v751 = vperm.slane %v747, 2
  %v752 = vperm.slane %v747, 3
  %v789 = vunpack.c.l.b16 %v714
  %v790 = vunpack.c.h.b16 %v714
  %v791 = vunpack.c.l.b16 %v715
  %v792 = vunpack.c.h.b16 %v715
  %v793 = vunpack.c.l.b16 %v716
  %v794 = vunpack.c.h.b16 %v716
  %v795 = vunpack.c.l.b16 %v717
  %v796 = vunpack.c.h.b16 %v717
  %v797 = vunpack.c.l.b16 %v718
  %v798 = vunpack.c.h.b16 %v718
  %v799 = vunpack.c.l.b16 %v719
  %v800 = vunpack.c.h.b16 %v719
  %v801 = vunpack.c.l.b16 %v720
  %v802 = vunpack.c.h.b16 %v720
  %v803 = vunpack.c.l.b16 %v721
  %v804 = vunpack.c.h.b16 %v721
  %v805 = vunpack.c.l.b16 %v722
  %v806 = vunpack.c.h.b16 %v722
  %v807 = vunpack.c.l.b16 %v723
  %v808 = vunpack.c.h.b16 %v723
  %v809 = vunpack.c.l.b16 %v724
  %v810 = vunpack.c.h.b16 %v724
  %v811 = vunpack.c.l.b16 %v725
  %v812 = vunpack.c.h.b16 %v725
  %v813 = vunpack.c.l.b16 %v726
  %v814 = vunpack.c.h.b16 %v726
  %v815 = vunpack.c.l.b16 %v727
  %v816 = vunpack.c.h.b16 %v727
  %v817 = vunpack.c.l.b16 %v728
  %v818 = vunpack.c.h.b16 %v728
  %v819 = vunpack.c.l.b16 %v729
  %v820 = vunpack.c.h.b16 %v729
  %v821 = vunpack.c.l.b16 %v730
  %v822 = vunpack.c.h.b16 %v730
  %v823 = vunpack.c.l.b16 %v731
  %v824 = vunpack.c.h.b16 %v731
  %v825 = vunpack.c.l.b16 %v732
  %v826 = vunpack.c.h.b16 %v732
  %v827 = vunpack.c.l.b16 %v733
  %v828 = vunpack.c.h.b16 %v733
  %v829 = vunpack.c.l.b16 %v734
  %v830 = vunpack.c.h.b16 %v734
  %v831 = vunpack.c.l.b16 %v735
  %v832 = vunpack.c.h.b16 %v735
  %v833 = vunpack.c.l.b16 %v736
  %v834 = vunpack.c.h.b16 %v736
  %v835 = vunpack.c.l.b16 %v737
  %v836 = vunpack.c.h.b16 %v737
  %v837 = vunpack.c.l.b16 %v738
  %v838 = vunpack.c.h.b16 %v738
  %v839 = vunpack.c.l.b16 %v739
  %v840 = vunpack.c.h.b16 %v739
  %v841 = vunpack.c.l.b16 %v740
  %v842 = vunpack.c.h.b16 %v740
  %v843 = vunpack.c.l.b16 %v741
  %v844 = vunpack.c.h.b16 %v741
  %v845 = vunpack.c.l.b16 %v742
  %v846 = vunpack.c.h.b16 %v742
  %v847 = vunpack.c.l.b16 %v743
  %v848 = vunpack.c.h.b16 %v743
  %v849 = vunpack.c.l.b16 %v744
  %v850 = vunpack.c.h.b16 %v744
  %v851 = vunpack.c.l.b16 %v745
  %v852 = vunpack.c.h.b16 %v745
  %v853 = vpack.c.b16 %v793, %v789
  %v854 = vpack.c.b16 %v794, %v790
  %v855 = vpack.c.b16 %v795, %v791
  %v856 = vpack.c.b16 %v796, %v792
  %v857 = vpack.c.b16 %v801, %v797
  %v858 = vpack.c.b16 %v802, %v798
  %v859 = vpack.c.b16 %v803, %v799
  %v860 = vpack.c.b16 %v804, %v800
  %v861 = vpack.c.b16 %v809, %v805
  %v862 = vpack.c.b16 %v810, %v806
  %v863 = vpack.c.b16 %v811, %v807
  %v864 = vpack.c.b16 %v812, %v808
  %v865 = vpack.c.b16 %v817, %v813
  %v866 = vpack.c.b16 %v818, %v814
  %v867 = vpack.c.b16 %v819, %v815
  %v868 = vpack.c.b16 %v820, %v816
  %v869 = vpack.c.b16 %v825, %v821
  %v870 = vpack.c.b16 %v826, %v822
  %v871 = vpack.c.b16 %v827, %v823
  %v872 = vpack.c.b16 %v828, %v824
  %v873 = vpack.c.b16 %v833, %v829
  %v874 = vpack.c.b16 %v834, %v830
  %v875 = vpack.c.b16 %v835, %v831
  %v876 = vpack.c.b16 %v836, %v832
  %v877 = vpack.c.b16 %v841, %v837
  %v878 = vpack.c.b16 %v842, %v838
  %v879 = vpack.c.b16 %v843, %v839
  %v880 = vpack.c.b16 %v844, %v840
  %v881 = vpack.c.b16 %v849, %v845
  %v882 = vpack.c.b16 %v850, %v846
  %v883 = vpack.c.b16 %v851, %v847
  %v884 = vpack.c.b16 %v852, %v848
  %917 = vmatpush.bf16.msra.mxu0 %v881
  %918 = vmatpush.bf16.msra.mxu0 %v877
  %919 = vmatpush.bf16.msra.mxu0 %v873
  %920 = vmatpush.bf16.msra.mxu0 %v869
  %921 = vmatpush.bf16.msra.mxu0 %v865
  %922 = vmatpush.bf16.msra.mxu0 %v861
  %923 = vmatpush.bf16.msra.mxu0 %v857
  %924 = vmatpush.bf16.msra.mxu0 %v853
  %925 = vmatmul.bf16.gmra.mxu0 %v710
  %v926 = vpop.f32.mrf.mxu0
  %v927 = vadd.f32 %v749, %v926
  %v928 = vpop.f32.mrf.mxu0
  %v929 = vadd.f32 %v749, %v928
  %930 = vmatmul.bf16.gmra.mxu0 %v711
  %v931 = vpop.f32.mrf.mxu0
  %v932 = vadd.f32 %v749, %v931
  %v933 = vpop.f32.mrf.mxu0
  %v934 = vadd.f32 %v749, %v933
  %935 = vmatmul.bf16.gmra.mxu0 %v712
  %v936 = vpop.f32.mrf.mxu0
  %v937 = vadd.f32 %v749, %v936
  %v938 = vpop.f32.mrf.mxu0
  %v939 = vadd.f32 %v749, %v938
  %940 = vmatmul.bf16.gmra.mxu0 %v713
  %v941 = vpop.f32.mrf.mxu0
  %v942 = vadd.f32 %v749, %v941
  %v943 = vpop.f32.mrf.mxu0
  %v944 = vadd.f32 %v749, %v943
  %945 = vdwg.mxu0
  %946 = vmatpush.bf16.msra.mxu0 %v882
  %947 = vmatpush.bf16.msra.mxu0 %v878
  %948 = vmatpush.bf16.msra.mxu0 %v874
  %949 = vmatpush.bf16.msra.mxu0 %v870
  %950 = vmatpush.bf16.msra.mxu0 %v866
  %951 = vmatpush.bf16.msra.mxu0 %v862
  %952 = vmatpush.bf16.msra.mxu0 %v858
  %953 = vmatpush.bf16.msra.mxu0 %v854
  %954 = vmatmul.bf16.gmra.mxu0 %v710
  %v955 = vpop.f32.mrf.mxu0
  %v956 = vadd.f32 %v750, %v955
  %v957 = vpop.f32.mrf.mxu0
  %v958 = vadd.f32 %v750, %v957
  %959 = vmatmul.bf16.gmra.mxu0 %v711
  %v960 = vpop.f32.mrf.mxu0
  %v961 = vadd.f32 %v750, %v960
  %v962 = vpop.f32.mrf.mxu0
  %v963 = vadd.f32 %v750, %v962
  %964 = vmatmul.bf16.gmra.mxu0 %v712
  %v965 = vpop.f32.mrf.mxu0
  %v966 = vadd.f32 %v750, %v965
  %v967 = vpop.f32.mrf.mxu0
  %v968 = vadd.f32 %v750, %v967
  %969 = vmatmul.bf16.gmra.mxu0 %v713
  %v970 = vpop.f32.mrf.mxu0
  %v971 = vadd.f32 %v750, %v970
  %v972 = vpop.f32.mrf.mxu0
  %v973 = vadd.f32 %v750, %v972
  %974 = vdwg.mxu0
  %975 = vmatpush.bf16.msra.mxu0 %v883
  %976 = vmatpush.bf16.msra.mxu0 %v879
  %977 = vmatpush.bf16.msra.mxu0 %v875
  %978 = vmatpush.bf16.msra.mxu0 %v871
  %979 = vmatpush.bf16.msra.mxu0 %v867
  %980 = vmatpush.bf16.msra.mxu0 %v863
  %981 = vmatpush.bf16.msra.mxu0 %v859
  %982 = vmatpush.bf16.msra.mxu0 %v855
  %983 = vmatmul.bf16.gmra.mxu0 %v710
  %v984 = vpop.f32.mrf.mxu0
  %v985 = vadd.f32 %v751, %v984
  %v986 = vpop.f32.mrf.mxu0
  %v987 = vadd.f32 %v751, %v986
  %988 = vmatmul.bf16.gmra.mxu0 %v711
  %v989 = vpop.f32.mrf.mxu0
  %v990 = vadd.f32 %v751, %v989
  %v991 = vpop.f32.mrf.mxu0
  %v992 = vadd.f32 %v751, %v991
  %993 = vmatmul.bf16.gmra.mxu0 %v712
  %v994 = vpop.f32.mrf.mxu0
  %v995 = vadd.f32 %v751, %v994
  %v996 = vpop.f32.mrf.mxu0
  %v997 = vadd.f32 %v751, %v996
  %998 = vmatmul.bf16.gmra.mxu0 %v713
  %v999 = vpop.f32.mrf.mxu0
  %v1000 = vadd.f32 %v751, %v999
  %v1001 = vpop.f32.mrf.mxu0
  %v1002 = vadd.f32 %v751, %v1001
  %1003 = vdwg.mxu0
  %1004 = vmatpush.bf16.msra.mxu0 %v884
  %1005 = vmatpush.bf16.msra.mxu0 %v880
  %1006 = vmatpush.bf16.msra.mxu0 %v876
  %1007 = vmatpush.bf16.msra.mxu0 %v872
  %1008 = vmatpush.bf16.msra.mxu0 %v868
  %1009 = vmatpush.bf16.msra.mxu0 %v864
  %1010 = vmatpush.bf16.msra.mxu0 %v860
  %1011 = vmatpush.bf16.msra.mxu0 %v856
  %1012 = vmatmul.bf16.gmra.mxu0 %v710
  %v1013 = vpop.f32.mrf.mxu0
  %v1014 = vadd.f32 %v752, %v1013
  %v1015 = vpop.f32.mrf.mxu0
  %v1016 = vadd.f32 %v752, %v1015
  %1017 = vmatmul.bf16.gmra.mxu0 %v711
  %v1018 = vpop.f32.mrf.mxu0
  %v1019 = vadd.f32 %v752, %v1018
  %v1020 = vpop.f32.mrf.mxu0
  %v1021 = vadd.f32 %v752, %v1020
  %1022 = vmatmul.bf16.gmra.mxu0 %v712
  %v1023 = vpop.f32.mrf.mxu0
  %v1024 = vadd.f32 %v752, %v1023
  %v1025 = vpop.f32.mrf.mxu0
  %v1026 = vadd.f32 %v752, %v1025
  %1027 = vmatmul.bf16.gmra.mxu0 %v713
  %v1028 = vpop.f32.mrf.mxu0
  %v1029 = vadd.f32 %v752, %v1028
  %v1030 = vpop.f32.mrf.mxu0
  %v1031 = vadd.f32 %v752, %v1030
  %1032 = vdwg.mxu0
  %1033 = vst [vmem:[#allocation2] sm:$0xff] %v927
  %1034 = vst [vmem:[#allocation2 + $0x8] sm:$0xff] %v956
  %1035 = vst [vmem:[#allocation2 + $0x10] sm:$0xff] %v985
  %1036 = vst [vmem:[#allocation2 + $0x18] sm:$0xff] %v1014
  %1037 = vst [vmem:[#allocation2 + $0x20] sm:$0xff] %v929
  %1038 = vst [vmem:[#allocation2 + $0x28] sm:$0xff] %v958
  %1039 = vst [vmem:[#allocation2 + $0x30] sm:$0xff] %v987
  %1040 = vst [vmem:[#allocation2 + $0x38] sm:$0xff] %v1016
  %1041 = vst [vmem:[#allocation2 + $0x40] sm:$0xff] %v932
  %1042 = vst [vmem:[#allocation2 + $0x48] sm:$0xff] %v961
  %1043 = vst [vmem:[#allocation2 + $0x50] sm:$0xff] %v990
  %1044 = vst [vmem:[#allocation2 + $0x58] sm:$0xff] %v1019
  %1045 = vst [vmem:[#allocation2 + $0x60] sm:$0xff] %v934
  %1046 = vst [vmem:[#allocation2 + $0x68] sm:$0xff] %v963
  %1047 = vst [vmem:[#allocation2 + $0x70] sm:$0xff] %v992
  %1048 = vst [vmem:[#allocation2 + $0x78] sm:$0xff] %v1021
  %1049 = vst [vmem:[#allocation2 + $0x80] sm:$0xff] %v937
  %1050 = vst [vmem:[#allocation2 + $0x88] sm:$0xff] %v966
  %1051 = vst [vmem:[#allocation2 + $0x90] sm:$0xff] %v995
  %1052 = vst [vmem:[#allocation2 + $0x98] sm:$0xff] %v1024
  %1053 = vst [vmem:[#allocation2 + $0xa0] sm:$0xff] %v939
  %1054 = vst [vmem:[#allocation2 + $0xa8] sm:$0xff] %v968
  %1055 = vst [vmem:[#allocation2 + $0xb0] sm:$0xff] %v997
  %1056 = vst [vmem:[#allocation2 + $0xb8] sm:$0xff] %v1026
  %1057 = vst [vmem:[#allocation2 + $0xc0] sm:$0xff] %v942
  %1058 = vst [vmem:[#allocation2 + $0xc8] sm:$0xff] %v971
  %1059 = vst [vmem:[#allocation2 + $0xd0] sm:$0xff] %v1000
  %1060 = vst [vmem:[#allocation2 + $0xd8] sm:$0xff] %v1029
  %1061 = vst [vmem:[#allocation2 + $0xe0] sm:$0xff] %v944
  %1062 = vst [vmem:[#allocation2 + $0xe8] sm:$0xff] %v973
  %1063 = vst [vmem:[#allocation2 + $0xf0] sm:$0xff] %v1002
  %1064 = vst [vmem:[#allocation2 + $0xf8] sm:$0xff] %v1031
  %s1065 = scalar_lea.vmem %s5, 256
  %v1066 = vld [vmem:[%s1065] sm:$0xff]
  %v1067 = vld [vmem:[%s1065 + $0x8] sm:$0xff]
  %v1068 = vld [vmem:[%s1065 + $0x10] sm:$0xff]
  %v1069 = vld [vmem:[%s1065 + $0x18] sm:$0xff]
  %v1070 = vld [vmem:[%s1065 + $0x20] sm:$0xff]
  %v1071 = vld [vmem:[%s1065 + $0x28] sm:$0xff]
  %v1072 = vld [vmem:[%s1065 + $0x30] sm:$0xff]
  %v1073 = vld [vmem:[%s1065 + $0x38] sm:$0xff]
  %v1074 = vld [vmem:[%s1065 + $0x40] sm:$0xff]
  %v1075 = vld [vmem:[%s1065 + $0x48] sm:$0xff]
  %v1076 = vld [vmem:[%s1065 + $0x50] sm:$0xff]
  %v1077 = vld [vmem:[%s1065 + $0x58] sm:$0xff]
  %v1078 = vld [vmem:[%s1065 + $0x60] sm:$0xff]
  %v1079 = vld [vmem:[%s1065 + $0x68] sm:$0xff]
  %v1080 = vld [vmem:[%s1065 + $0x70] sm:$0xff]
  %v1081 = vld [vmem:[%s1065 + $0x78] sm:$0xff]
  %v1082 = vld [vmem:[%s1065 + $0x80] sm:$0xff]
  %v1083 = vld [vmem:[%s1065 + $0x88] sm:$0xff]
  %v1084 = vld [vmem:[%s1065 + $0x90] sm:$0xff]
  %v1085 = vld [vmem:[%s1065 + $0x98] sm:$0xff]
  %v1086 = vld [vmem:[%s1065 + $0xa0] sm:$0xff]
  %v1087 = vld [vmem:[%s1065 + $0xa8] sm:$0xff]
  %v1088 = vld [vmem:[%s1065 + $0xb0] sm:$0xff]
  %v1089 = vld [vmem:[%s1065 + $0xb8] sm:$0xff]
  %v1090 = vld [vmem:[%s1065 + $0xc0] sm:$0xff]
  %v1091 = vld [vmem:[%s1065 + $0xc8] sm:$0xff]
  %v1092 = vld [vmem:[%s1065 + $0xd0] sm:$0xff]
  %v1093 = vld [vmem:[%s1065 + $0xd8] sm:$0xff]
  %v1094 = vld [vmem:[%s1065 + $0xe0] sm:$0xff]
  %v1095 = vld [vmem:[%s1065 + $0xe8] sm:$0xff]
  %v1096 = vld [vmem:[%s1065 + $0xf0] sm:$0xff]
  %v1097 = vld [vmem:[%s1065 + $0xf8] sm:$0xff]
  %s1098 = scalar_lea.vmem %s1, 8
  %v1099 = vld [vmem:[%s1098] sm:$0xff]
  %s1100 = scalar_lea.vmem %s2, 8
  %v1101 = vld [vmem:[%s1100] sm:$0xff]
  loop: start=0, step=1, limit=8
  $region37: #{music_rnn_forward.2} parent=0 // loop_pre_header
    _
  $region38: #{music_rnn_forward.2} parent=0 // loop_header
    %s1103 = sphi 0, %s1107
    %p1104 = scmp.ge.s32.totalorder %s1103, 8
    %v1108 = vphi %v1099, %v1354
    %v1109 = vphi %v1101, %v1352
  $region39: #{music_rnn_forward.2} parent=0 // loop_header_branch
    %1106 = sbr.rel (%p1104) target = $region43
  $region40: #{music_rnn_forward.2} parent=0 // loop_body
    %s1110 = smul.u32 %s1103, 8
    %s1111 = sshra.s32 %s1110, 3
    %s1112 = sand.u32 %s1110, 7
    %s1113 = smul.u32 %s1111, 4
    %s1114 = smul.addr %s1113, 8
    %s1115 = scalar_lea.vmem [#allocation2], %s1114
    %v1116 = vld [vmem:[%s1115] sm:$0xff]
    %v1117 = vld [vmem:[%s1115 + $0x8] sm:$0xff]
    %v1118 = vld [vmem:[%s1115 + $0x10] sm:$0xff]
    %v1119 = vld [vmem:[%s1115 + $0x18] sm:$0xff]
    %v1120 = vpack.c.bf16 %v1108, %v1108
    %v1153 = vunpack.c.l.b16 %v1066
    %v1154 = vunpack.c.h.b16 %v1066
    %v1155 = vunpack.c.l.b16 %v1067
    %v1156 = vunpack.c.h.b16 %v1067
    %v1157 = vunpack.c.l.b16 %v1068
    %v1158 = vunpack.c.h.b16 %v1068
    %v1159 = vunpack.c.l.b16 %v1069
    %v1160 = vunpack.c.h.b16 %v1069
    %v1161 = vunpack.c.l.b16 %v1070
    %v1162 = vunpack.c.h.b16 %v1070
    %v1163 = vunpack.c.l.b16 %v1071
    %v1164 = vunpack.c.h.b16 %v1071
    %v1165 = vunpack.c.l.b16 %v1072
    %v1166 = vunpack.c.h.b16 %v1072
    %v1167 = vunpack.c.l.b16 %v1073
    %v1168 = vunpack.c.h.b16 %v1073
    %v1169 = vunpack.c.l.b16 %v1074
    %v1170 = vunpack.c.h.b16 %v1074
    %v1171 = vunpack.c.l.b16 %v1075
    %v1172 = vunpack.c.h.b16 %v1075
    %v1173 = vunpack.c.l.b16 %v1076
    %v1174 = vunpack.c.h.b16 %v1076
    %v1175 = vunpack.c.l.b16 %v1077
    %v1176 = vunpack.c.h.b16 %v1077
    %v1177 = vunpack.c.l.b16 %v1078
    %v1178 = vunpack.c.h.b16 %v1078
    %v1179 = vunpack.c.l.b16 %v1079
    %v1180 = vunpack.c.h.b16 %v1079
    %v1181 = vunpack.c.l.b16 %v1080
    %v1182 = vunpack.c.h.b16 %v1080
    %v1183 = vunpack.c.l.b16 %v1081
    %v1184 = vunpack.c.h.b16 %v1081
    %v1185 = vunpack.c.l.b16 %v1082
    %v1186 = vunpack.c.h.b16 %v1082
    %v1187 = vunpack.c.l.b16 %v1083
    %v1188 = vunpack.c.h.b16 %v1083
    %v1189 = vunpack.c.l.b16 %v1084
    %v1190 = vunpack.c.h.b16 %v1084
    %v1191 = vunpack.c.l.b16 %v1085
    %v1192 = vunpack.c.h.b16 %v1085
    %v1193 = vunpack.c.l.b16 %v1086
    %v1194 = vunpack.c.h.b16 %v1086
    %v1195 = vunpack.c.l.b16 %v1087
    %v1196 = vunpack.c.h.b16 %v1087
    %v1197 = vunpack.c.l.b16 %v1088
    %v1198 = vunpack.c.h.b16 %v1088
    %v1199 = vunpack.c.l.b16 %v1089
    %v1200 = vunpack.c.h.b16 %v1089
    %v1201 = vunpack.c.l.b16 %v1090
    %v1202 = vunpack.c.h.b16 %v1090
    %v1203 = vunpack.c.l.b16 %v1091
    %v1204 = vunpack.c.h.b16 %v1091
    %v1205 = vunpack.c.l.b16 %v1092
    %v1206 = vunpack.c.h.b16 %v1092
    %v1207 = vunpack.c.l.b16 %v1093
    %v1208 = vunpack.c.h.b16 %v1093
    %v1209 = vunpack.c.l.b16 %v1094
    %v1210 = vunpack.c.h.b16 %v1094
    %v1211 = vunpack.c.l.b16 %v1095
    %v1212 = vunpack.c.h.b16 %v1095
    %v1213 = vunpack.c.l.b16 %v1096
    %v1214 = vunpack.c.h.b16 %v1096
    %v1215 = vunpack.c.l.b16 %v1097
    %v1216 = vunpack.c.h.b16 %v1097
    %v1217 = vpack.c.b16 %v1157, %v1153
    %v1218 = vpack.c.b16 %v1158, %v1154
    %v1219 = vpack.c.b16 %v1159, %v1155
    %v1220 = vpack.c.b16 %v1160, %v1156
    %v1221 = vpack.c.b16 %v1165, %v1161
    %v1222 = vpack.c.b16 %v1166, %v1162
    %v1223 = vpack.c.b16 %v1167, %v1163
    %v1224 = vpack.c.b16 %v1168, %v1164
    %v1225 = vpack.c.b16 %v1173, %v1169
    %v1226 = vpack.c.b16 %v1174, %v1170
    %v1227 = vpack.c.b16 %v1175, %v1171
    %v1228 = vpack.c.b16 %v1176, %v1172
    %v1229 = vpack.c.b16 %v1181, %v1177
    %v1230 = vpack.c.b16 %v1182, %v1178
    %v1231 = vpack.c.b16 %v1183, %v1179
    %v1232 = vpack.c.b16 %v1184, %v1180
    %v1233 = vpack.c.b16 %v1189, %v1185
    %v1234 = vpack.c.b16 %v1190, %v1186
    %v1235 = vpack.c.b16 %v1191, %v1187
    %v1236 = vpack.c.b16 %v1192, %v1188
    %v1237 = vpack.c.b16 %v1197, %v1193
    %v1238 = vpack.c.b16 %v1198, %v1194
    %v1239 = vpack.c.b16 %v1199, %v1195
    %v1240 = vpack.c.b16 %v1200, %v1196
    %v1241 = vpack.c.b16 %v1205, %v1201
    %v1242 = vpack.c.b16 %v1206, %v1202
    %v1243 = vpack.c.b16 %v1207, %v1203
    %v1244 = vpack.c.b16 %v1208, %v1204
    %v1245 = vpack.c.b16 %v1213, %v1209
    %v1246 = vpack.c.b16 %v1214, %v1210
    %v1247 = vpack.c.b16 %v1215, %v1211
    %v1248 = vpack.c.b16 %v1216, %v1212
    %1281 = vmatpush.bf16.msra.mxu0 %v1245
    %1282 = vmatpush.bf16.msra.mxu0 %v1241
    %1283 = vmatpush.bf16.msra.mxu0 %v1237
    %1284 = vmatpush.bf16.msra.mxu0 %v1233
    %1285 = vmatpush.bf16.msra.mxu0 %v1229
    %1286 = vmatpush.bf16.msra.mxu0 %v1225
    %1287 = vmatpush.bf16.msra.mxu0 %v1221
    %1288 = vmatpush.bf16.msra.mxu0 %v1217
    %1289 = vmatmul.bf16.gmra.mxu0 %v1120
    %v1290 = vpop.f32.mrf.mxu0
    %v1291 = vadd.f32 0.0, %v1290
    %v1292 = vpop.f32.mrf.mxu0
    %1293 = vdwg.mxu0
    %1294 = vmatpush.bf16.msra.mxu0 %v1246
    %1295 = vmatpush.bf16.msra.mxu0 %v1242
    %1296 = vmatpush.bf16.msra.mxu0 %v1238
    %1297 = vmatpush.bf16.msra.mxu0 %v1234
    %1298 = vmatpush.bf16.msra.mxu0 %v1230
    %1299 = vmatpush.bf16.msra.mxu0 %v1226
    %1300 = vmatpush.bf16.msra.mxu0 %v1222
    %1301 = vmatpush.bf16.msra.mxu0 %v1218
    %1302 = vmatmul.bf16.gmra.mxu0 %v1120
    %v1303 = vpop.f32.mrf.mxu0
    %v1304 = vadd.f32 0.0, %v1303
    %v1305 = vpop.f32.mrf.mxu0
    %1306 = vdwg.mxu0
    %1307 = vmatpush.bf16.msra.mxu0 %v1247
    %1308 = vmatpush.bf16.msra.mxu0 %v1243
    %1309 = vmatpush.bf16.msra.mxu0 %v1239
    %1310 = vmatpush.bf16.msra.mxu0 %v1235
    %1311 = vmatpush.bf16.msra.mxu0 %v1231
    %1312 = vmatpush.bf16.msra.mxu0 %v1227
    %1313 = vmatpush.bf16.msra.mxu0 %v1223
    %1314 = vmatpush.bf16.msra.mxu0 %v1219
    %1315 = vmatmul.bf16.gmra.mxu0 %v1120
    %v1316 = vpop.f32.mrf.mxu0
    %v1317 = vadd.f32 0.0, %v1316
    %v1318 = vpop.f32.mrf.mxu0
    %1319 = vdwg.mxu0
    %1320 = vmatpush.bf16.msra.mxu0 %v1248
    %1321 = vmatpush.bf16.msra.mxu0 %v1244
    %1322 = vmatpush.bf16.msra.mxu0 %v1240
    %1323 = vmatpush.bf16.msra.mxu0 %v1236
    %1324 = vmatpush.bf16.msra.mxu0 %v1232
    %1325 = vmatpush.bf16.msra.mxu0 %v1228
    %1326 = vmatpush.bf16.msra.mxu0 %v1224
    %1327 = vmatpush.bf16.msra.mxu0 %v1220
    %1328 = vmatmul.bf16.gmra.mxu0 %v1120
    %v1329 = vpop.f32.mrf.mxu0
    %v1330 = vadd.f32 0.0, %v1329
    %v1331 = vpop.f32.mrf.mxu0
    %1332 = vdwg.mxu0
    %v1333 = vadd.f32 %v1116, %v1291
    %v1334 = vadd.f32 %v1117, %v1304
    %v1335 = vadd.f32 %v1118, %v1317
    %v1336 = vadd.f32 %v1119, %v1330
    %v1337 = vmul.f32 %v1333, 0.5
    %v1338 = vtanh.pop %v1337
    %v1339 = vadd.f32 %v1338, 1.0
    %v1340 = vmul.f32 %v1339, 0.5
    %v1341 = vmul.f32 %v1334, 0.5
    %v1342 = vtanh.pop %v1341
    %v1343 = vadd.f32 %v1342, 1.0
    %v1344 = vmul.f32 %v1343, 0.5
    %v1345 = vtanh.pop %v1335
    %v1346 = vmul.f32 %v1336, 0.5
    %v1347 = vtanh.pop %v1346
    %v1348 = vadd.f32 %v1347, 1.0
    %v1349 = vmul.f32 %v1348, 0.5
    %v1350 = vmul.f32 %v1344, %v1109
    %v1351 = vmul.f32 %v1340, %v1345
    %v1352 = vadd.f32 %v1350, %v1351
    %v1353 = vtanh.pop %v1352
    %v1354 = vmul.f32 %v1349, %v1353
    %s1355 = scalar_lea.vmem %s7, %s1110
    %1356 = vst [vmem:[%s1355] sm:$0xff] %v1354
  $region41: #{music_rnn_forward.2} parent=0 // loop_footer
    %s1107 = sadd.s32 1, %s1103
  $region42: #{music_rnn_forward.2} parent=0 // loop_footer_branch
    %1102 = sbr.rel target = $region38
  $region43: #{music_rnn_forward.2} parent=0 // loop_exit
    _
  %s1357 = scalar_lea.vmem %s8, 8
  %1358 = vst [vmem:[%s1357] sm:$0xff] %v1108
  %s1359 = scalar_lea.vmem %s9, 8
  %1360 = vst [vmem:[%s1359] sm:$0xff] %v1109
  %v1361 = vld [vmem:[%s7] sm:$0xff]
  %v1362 = vld [vmem:[%s7 + $0x8] sm:$0xff]
  %v1363 = vld [vmem:[%s7 + $0x10] sm:$0xff]
  %v1364 = vld [vmem:[%s7 + $0x18] sm:$0xff]
  %v1365 = vld [vmem:[%s7 + $0x20] sm:$0xff]
  %v1366 = vld [vmem:[%s7 + $0x28] sm:$0xff]
  %v1367 = vld [vmem:[%s7 + $0x30] sm:$0xff]
  %v1368 = vld [vmem:[%s7 + $0x38] sm:$0xff]
  %v1369 = vpack.c.bf16 %v1362, %v1361
  %v1370 = vpack.c.bf16 %v1364, %v1363
  %v1371 = vpack.c.bf16 %v1366, %v1365
  %v1372 = vpack.c.bf16 %v1368, %v1367
  %s1373 = scalar_lea.vmem %s4, 256
  %v1374 = vld [vmem:[%s1373] sm:$0xff]
  %v1375 = vld [vmem:[%s1373 + $0x8] sm:$0xff]
  %v1376 = vld [vmem:[%s1373 + $0x10] sm:$0xff]
  %v1377 = vld [vmem:[%s1373 + $0x18] sm:$0xff]
  %v1378 = vld [vmem:[%s1373 + $0x20] sm:$0xff]
  %v1379 = vld [vmem:[%s1373 + $0x28] sm:$0xff]
  %v1380 = vld [vmem:[%s1373 + $0x30] sm:$0xff]
  %v1381 = vld [vmem:[%s1373 + $0x38] sm:$0xff]
  %v1382 = vld [vmem:[%s1373 + $0x40] sm:$0xff]
  %v1383 = vld [vmem:[%s1373 + $0x48] sm:$0xff]
  %v1384 = vld [vmem:[%s1373 + $0x50] sm:$0xff]
  %v1385 = vld [vmem:[%s1373 + $0x58] sm:$0xff]
  %v1386 = vld [vmem:[%s1373 + $0x60] sm:$0xff]
  %v1387 = vld [vmem:[%s1373 + $0x68] sm:$0xff]
  %v1388 = vld [vmem:[%s1373 + $0x70] sm:$0xff]
  %v1389 = vld [vmem:[%s1373 + $0x78] sm:$0xff]
  %v1390 = vld [vmem:[%s1373 + $0x80] sm:$0xff]
  %v1391 = vld [vmem:[%s1373 + $0x88] sm:$0xff]
  %v1392 = vld [vmem:[%s1373 + $0x90] sm:$0xff]
  %v1393 = vld [vmem:[%s1373 + $0x98] sm:$0xff]
  %v1394 = vld [vmem:[%s1373 + $0xa0] sm:$0xff]
  %v1395 = vld [vmem:[%s1373 + $0xa8] sm:$0xff]
  %v1396 = vld [vmem:[%s1373 + $0xb0] sm:$0xff]
  %v1397 = vld [vmem:[%s1373 + $0xb8] sm:$0xff]
  %v1398 = vld [vmem:[%s1373 + $0xc0] sm:$0xff]
  %v1399 = vld [vmem:[%s1373 + $0xc8] sm:$0xff]
  %v1400 = vld [vmem:[%s1373 + $0xd0] sm:$0xff]
  %v1401 = vld [vmem:[%s1373 + $0xd8] sm:$0xff]
  %v1402 = vld [vmem:[%s1373 + $0xe0] sm:$0xff]
  %v1403 = vld [vmem:[%s1373 + $0xe8] sm:$0xff]
  %v1404 = vld [vmem:[%s1373 + $0xf0] sm:$0xff]
  %v1405 = vld [vmem:[%s1373 + $0xf8] sm:$0xff]
  %s1406 = scalar_lea.vmem %s6, 8
  %v1407 = vld [vmem:[%s1406] sm:$0xf]
  %v1409 = vperm.slane %v1407, 0
  %v1410 = vperm.slane %v1407, 1
  %v1411 = vperm.slane %v1407, 2
  %v1412 = vperm.slane %v1407, 3
  %v1449 = vunpack.c.l.b16 %v1374
  %v1450 = vunpack.c.h.b16 %v1374
  %v1451 = vunpack.c.l.b16 %v1375
  %v1452 = vunpack.c.h.b16 %v1375
  %v1453 = vunpack.c.l.b16 %v1376
  %v1454 = vunpack.c.h.b16 %v1376
  %v1455 = vunpack.c.l.b16 %v1377
  %v1456 = vunpack.c.h.b16 %v1377
  %v1457 = vunpack.c.l.b16 %v1378
  %v1458 = vunpack.c.h.b16 %v1378
  %v1459 = vunpack.c.l.b16 %v1379
  %v1460 = vunpack.c.h.b16 %v1379
  %v1461 = vunpack.c.l.b16 %v1380
  %v1462 = vunpack.c.h.b16 %v1380
  %v1463 = vunpack.c.l.b16 %v1381
  %v1464 = vunpack.c.h.b16 %v1381
  %v1465 = vunpack.c.l.b16 %v1382
  %v1466 = vunpack.c.h.b16 %v1382
  %v1467 = vunpack.c.l.b16 %v1383
  %v1468 = vunpack.c.h.b16 %v1383
  %v1469 = vunpack.c.l.b16 %v1384
  %v1470 = vunpack.c.h.b16 %v1384
  %v1471 = vunpack.c.l.b16 %v1385
  %v1472 = vunpack.c.h.b16 %v1385
  %v1473 = vunpack.c.l.b16 %v1386
  %v1474 = vunpack.c.h.b16 %v1386
  %v1475 = vunpack.c.l.b16 %v1387
  %v1476 = vunpack.c.h.b16 %v1387
  %v1477 = vunpack.c.l.b16 %v1388
  %v1478 = vunpack.c.h.b16 %v1388
  %v1479 = vunpack.c.l.b16 %v1389
  %v1480 = vunpack.c.h.b16 %v1389
  %v1481 = vunpack.c.l.b16 %v1390
  %v1482 = vunpack.c.h.b16 %v1390
  %v1483 = vunpack.c.l.b16 %v1391
  %v1484 = vunpack.c.h.b16 %v1391
  %v1485 = vunpack.c.l.b16 %v1392
  %v1486 = vunpack.c.h.b16 %v1392
  %v1487 = vunpack.c.l.b16 %v1393
  %v1488 = vunpack.c.h.b16 %v1393
  %v1489 = vunpack.c.l.b16 %v1394
  %v1490 = vunpack.c.h.b16 %v1394
  %v1491 = vunpack.c.l.b16 %v1395
  %v1492 = vunpack.c.h.b16 %v1395
  %v1493 = vunpack.c.l.b16 %v1396
  %v1494 = vunpack.c.h.b16 %v1396
  %v1495 = vunpack.c.l.b16 %v1397
  %v1496 = vunpack.c.h.b16 %v1397
  %v1497 = vunpack.c.l.b16 %v1398
  %v1498 = vunpack.c.h.b16 %v1398
  %v1499 = vunpack.c.l.b16 %v1399
  %v1500 = vunpack.c.h.b16 %v1399
  %v1501 = vunpack.c.l.b16 %v1400
  %v1502 = vunpack.c.h.b16 %v1400
  %v1503 = vunpack.c.l.b16 %v1401
  %v1504 = vunpack.c.h.b16 %v1401
  %v1505 = vunpack.c.l.b16 %v1402
  %v1506 = vunpack.c.h.b16 %v1402
  %v1507 = vunpack.c.l.b16 %v1403
  %v1508 = vunpack.c.h.b16 %v1403
  %v1509 = vunpack.c.l.b16 %v1404
  %v1510 = vunpack.c.h.b16 %v1404
  %v1511 = vunpack.c.l.b16 %v1405
  %v1512 = vunpack.c.h.b16 %v1405
  %v1513 = vpack.c.b16 %v1453, %v1449
  %v1514 = vpack.c.b16 %v1454, %v1450
  %v1515 = vpack.c.b16 %v1455, %v1451
  %v1516 = vpack.c.b16 %v1456, %v1452
  %v1517 = vpack.c.b16 %v1461, %v1457
  %v1518 = vpack.c.b16 %v1462, %v1458
  %v1519 = vpack.c.b16 %v1463, %v1459
  %v1520 = vpack.c.b16 %v1464, %v1460
  %v1521 = vpack.c.b16 %v1469, %v1465
  %v1522 = vpack.c.b16 %v1470, %v1466
  %v1523 = vpack.c.b16 %v1471, %v1467
  %v1524 = vpack.c.b16 %v1472, %v1468
  %v1525 = vpack.c.b16 %v1477, %v1473
  %v1526 = vpack.c.b16 %v1478, %v1474
  %v1527 = vpack.c.b16 %v1479, %v1475
  %v1528 = vpack.c.b16 %v1480, %v1476
  %v1529 = vpack.c.b16 %v1485, %v1481
  %v1530 = vpack.c.b16 %v1486, %v1482
  %v1531 = vpack.c.b16 %v1487, %v1483
  %v1532 = vpack.c.b16 %v1488, %v1484
  %v1533 = vpack.c.b16 %v1493, %v1489
  %v1534 = vpack.c.b16 %v1494, %v1490
  %v1535 = vpack.c.b16 %v1495, %v1491
  %v1536 = vpack.c.b16 %v1496, %v1492
  %v1537 = vpack.c.b16 %v1501, %v1497
  %v1538 = vpack.c.b16 %v1502, %v1498
  %v1539 = vpack.c.b16 %v1503, %v1499
  %v1540 = vpack.c.b16 %v1504, %v1500
  %v1541 = vpack.c.b16 %v1509, %v1505
  %v1542 = vpack.c.b16 %v1510, %v1506
  %v1543 = vpack.c.b16 %v1511, %v1507
  %v1544 = vpack.c.b16 %v1512, %v1508
  %1577 = vmatpush.bf16.msra.mxu0 %v1541
  %1578 = vmatpush.bf16.msra.mxu0 %v1537
  %1579 = vmatpush.bf16.msra.mxu0 %v1533
  %1580 = vmatpush.bf16.msra.mxu0 %v1529
  %1581 = vmatpush.bf16.msra.mxu0 %v1525
  %1582 = vmatpush.bf16.msra.mxu0 %v1521
  %1583 = vmatpush.bf16.msra.mxu0 %v1517
  %1584 = vmatpush.bf16.msra.mxu0 %v1513
  %1585 = vmatmul.bf16.gmra.mxu0 %v1369
  %v1586 = vpop.f32.mrf.mxu0
  %v1587 = vadd.f32 %v1409, %v1586
  %v1588 = vpop.f32.mrf.mxu0
  %v1589 = vadd.f32 %v1409, %v1588
  %1590 = vmatmul.bf16.gmra.mxu0 %v1370
  %v1591 = vpop.f32.mrf.mxu0
  %v1592 = vadd.f32 %v1409, %v1591
  %v1593 = vpop.f32.mrf.mxu0
  %v1594 = vadd.f32 %v1409, %v1593
  %1595 = vmatmul.bf16.gmra.mxu0 %v1371
  %v1596 = vpop.f32.mrf.mxu0
  %v1597 = vadd.f32 %v1409, %v1596
  %v1598 = vpop.f32.mrf.mxu0
  %v1599 = vadd.f32 %v1409, %v1598
  %1600 = vmatmul.bf16.gmra.mxu0 %v1372
  %v1601 = vpop.f32.mrf.mxu0
  %v1602 = vadd.f32 %v1409, %v1601
  %v1603 = vpop.f32.mrf.mxu0
  %v1604 = vadd.f32 %v1409, %v1603
  %1605 = vdwg.mxu0
  %1606 = vmatpush.bf16.msra.mxu0 %v1542
  %1607 = vmatpush.bf16.msra.mxu0 %v1538
  %1608 = vmatpush.bf16.msra.mxu0 %v1534
  %1609 = vmatpush.bf16.msra.mxu0 %v1530
  %1610 = vmatpush.bf16.msra.mxu0 %v1526
  %1611 = vmatpush.bf16.msra.mxu0 %v1522
  %1612 = vmatpush.bf16.msra.mxu0 %v1518
  %1613 = vmatpush.bf16.msra.mxu0 %v1514
  %1614 = vmatmul.bf16.gmra.mxu0 %v1369
  %v1615 = vpop.f32.mrf.mxu0
  %v1616 = vadd.f32 %v1410, %v1615
  %v1617 = vpop.f32.mrf.mxu0
  %v1618 = vadd.f32 %v1410, %v1617
  %1619 = vmatmul.bf16.gmra.mxu0 %v1370
  %v1620 = vpop.f32.mrf.mxu0
  %v1621 = vadd.f32 %v1410, %v1620
  %v1622 = vpop.f32.mrf.mxu0
  %v1623 = vadd.f32 %v1410, %v1622
  %1624 = vmatmul.bf16.gmra.mxu0 %v1371
  %v1625 = vpop.f32.mrf.mxu0
  %v1626 = vadd.f32 %v1410, %v1625
  %v1627 = vpop.f32.mrf.mxu0
  %v1628 = vadd.f32 %v1410, %v1627
  %1629 = vmatmul.bf16.gmra.mxu0 %v1372
  %v1630 = vpop.f32.mrf.mxu0
  %v1631 = vadd.f32 %v1410, %v1630
  %v1632 = vpop.f32.mrf.mxu0
  %v1633 = vadd.f32 %v1410, %v1632
  %1634 = vdwg.mxu0
  %1635 = vmatpush.bf16.msra.mxu0 %v1543
  %1636 = vmatpush.bf16.msra.mxu0 %v1539
  %1637 = vmatpush.bf16.msra.mxu0 %v1535
  %1638 = vmatpush.bf16.msra.mxu0 %v1531
  %1639 = vmatpush.bf16.msra.mxu0 %v1527
  %1640 = vmatpush.bf16.msra.mxu0 %v1523
  %1641 = vmatpush.bf16.msra.mxu0 %v1519
  %1642 = vmatpush.bf16.msra.mxu0 %v1515
  %1643 = vmatmul.bf16.gmra.mxu0 %v1369
  %v1644 = vpop.f32.mrf.mxu0
  %v1645 = vadd.f32 %v1411, %v1644
  %v1646 = vpop.f32.mrf.mxu0
  %v1647 = vadd.f32 %v1411, %v1646
  %1648 = vmatmul.bf16.gmra.mxu0 %v1370
  %v1649 = vpop.f32.mrf.mxu0
  %v1650 = vadd.f32 %v1411, %v1649
  %v1651 = vpop.f32.mrf.mxu0
  %v1652 = vadd.f32 %v1411, %v1651
  %1653 = vmatmul.bf16.gmra.mxu0 %v1371
  %v1654 = vpop.f32.mrf.mxu0
  %v1655 = vadd.f32 %v1411, %v1654
  %v1656 = vpop.f32.mrf.mxu0
  %v1657 = vadd.f32 %v1411, %v1656
  %1658 = vmatmul.bf16.gmra.mxu0 %v1372
  %v1659 = vpop.f32.mrf.mxu0
  %v1660 = vadd.f32 %v1411, %v1659
  %v1661 = vpop.f32.mrf.mxu0
  %v1662 = vadd.f32 %v1411, %v1661
  %1663 = vdwg.mxu0
  %1664 = vmatpush.bf16.msra.mxu0 %v1544
  %1665 = vmatpush.bf16.msra.mxu0 %v1540
  %1666 = vmatpush.bf16.msra.mxu0 %v1536
  %1667 = vmatpush.bf16.msra.mxu0 %v1532
  %1668 = vmatpush.bf16.msra.mxu0 %v1528
  %1669 = vmatpush.bf16.msra.mxu0 %v1524
  %1670 = vmatpush.bf16.msra.mxu0 %v1520
  %1671 = vmatpush.bf16.msra.mxu0 %v1516
  %1672 = vmatmul.bf16.gmra.mxu0 %v1369
  %v1673 = vpop.f32.mrf.mxu0
  %v1674 = vadd.f32 %v1412, %v1673
  %v1675 = vpop.f32.mrf.mxu0
  %v1676 = vadd.f32 %v1412, %v1675
  %1677 = vmatmul.bf16.gmra.mxu0 %v1370
  %v1678 = vpop.f32.mrf.mxu0
  %v1679 = vadd.f32 %v1412, %v1678
  %v1680 = vpop.f32.mrf.mxu0
  %v1681 = vadd.f32 %v1412, %v1680
  %1682 = vmatmul.bf16.gmra.mxu0 %v1371
  %v1683 = vpop.f32.mrf.mxu0
  %v1684 = vadd.f32 %v1412, %v1683
  %v1685 = vpop.f32.mrf.mxu0
  %v1686 = vadd.f32 %v1412, %v1685
  %1687 = vmatmul.bf16.gmra.mxu0 %v1372
  %v1688 = vpop.f32.mrf.mxu0
  %v1689 = vadd.f32 %v1412, %v1688
  %v1690 = vpop.f32.mrf.mxu0
  %v1691 = vadd.f32 %v1412, %v1690
  %1692 = vdwg.mxu0
  %1693 = vst [vmem:[#allocation2] sm:$0xff] %v1587
  %1694 = vst [vmem:[#allocation2 + $0x8] sm:$0xff] %v1616
  %1695 = vst [vmem:[#allocation2 + $0x10] sm:$0xff] %v1645
  %1696 = vst [vmem:[#allocation2 + $0x18] sm:$0xff] %v1674
  %1697 = vst [vmem:[#allocation2 + $0x20] sm:$0xff] %v1589
  %1698 = vst [vmem:[#allocation2 + $0x28] sm:$0xff] %v1618
  %1699 = vst [vmem:[#allocation2 + $0x30] sm:$0xff] %v1647
  %1700 = vst [vmem:[#allocation2 + $0x38] sm:$0xff] %v1676
  %1701 = vst [vmem:[#allocation2 + $0x40] sm:$0xff] %v1592
  %1702 = vst [vmem:[#allocation2 + $0x48] sm:$0xff] %v1621
  %1703 = vst [vmem:[#allocation2 + $0x50] sm:$0xff] %v1650
  %1704 = vst [vmem:[#allocation2 + $0x58] sm:$0xff] %v1679
  %1705 = vst [vmem:[#allocation2 + $0x60] sm:$0xff] %v1594
  %1706 = vst [vmem:[#allocation2 + $0x68] sm:$0xff] %v1623
  %1707 = vst [vmem:[#allocation2 + $0x70] sm:$0xff] %v1652
  %1708 = vst [vmem:[#allocation2 + $0x78] sm:$0xff] %v1681
  %1709 = vst [vmem:[#allocation2 + $0x80] sm:$0xff] %v1597
  %1710 = vst [vmem:[#allocation2 + $0x88] sm:$0xff] %v1626
  %1711 = vst [vmem:[#allocation2 + $0x90] sm:$0xff] %v1655
  %1712 = vst [vmem:[#allocation2 + $0x98] sm:$0xff] %v1684
  %1713 = vst [vmem:[#allocation2 + $0xa0] sm:$0xff] %v1599
  %1714 = vst [vmem:[#allocation2 + $0xa8] sm:$0xff] %v1628
  %1715 = vst [vmem:[#allocation2 + $0xb0] sm:$0xff] %v1657
  %1716 = vst [vmem:[#allocation2 + $0xb8] sm:$0xff] %v1686
  %1717 = vst [vmem:[#allocation2 + $0xc0] sm:$0xff] %v1602
  %1718 = vst [vmem:[#allocation2 + $0xc8] sm:$0xff] %v1631
  %1719 = vst [vmem:[#allocation2 + $0xd0] sm:$0xff] %v1660
  %1720 = vst [vmem:[#allocation2 + $0xd8] sm:$0xff] %v1689
  %1721 = vst [vmem:[#allocation2 + $0xe0] sm:$0xff] %v1604
  %1722 = vst [vmem:[#allocation2 + $0xe8] sm:$0xff] %v1633
  %1723 = vst [vmem:[#allocation2 + $0xf0] sm:$0xff] %v1662
  %1724 = vst [vmem:[#allocation2 + $0xf8] sm:$0xff] %v1691
  %s1725 = scalar_lea.vmem %s5, 512
  %v1726 = vld [vmem:[%s1725] sm:$0xff]
  %v1727 = vld [vmem:[%s1725 + $0x8] sm:$0xff]
  %v1728 = vld [vmem:[%s1725 + $0x10] sm:$0xff]
  %v1729 = vld [vmem:[%s1725 + $0x18] sm:$0xff]
  %v1730 = vld [vmem:[%s1725 + $0x20] sm:$0xff]
  %v1731 = vld [vmem:[%s1725 + $0x28] sm:$0xff]
  %v1732 = vld [vmem:[%s1725 + $0x30] sm:$0xff]
  %v1733 = vld [vmem:[%s1725 + $0x38] sm:$0xff]
  %v1734 = vld [vmem:[%s1725 + $0x40] sm:$0xff]
  %v1735 = vld [vmem:[%s1725 + $0x48] sm:$0xff]
  %v1736 = vld [vmem:[%s1725 + $0x50] sm:$0xff]
  %v1737 = vld [vmem:[%s1725 + $0x58] sm:$0xff]
  %v1738 = vld [vmem:[%s1725 + $0x60] sm:$0xff]
  %v1739 = vld [vmem:[%s1725 + $0x68] sm:$0xff]
  %v1740 = vld [vmem:[%s1725 + $0x70] sm:$0xff]
  %v1741 = vld [vmem:[%s1725 + $0x78] sm:$0xff]
  %v1742 = vld [vmem:[%s1725 + $0x80] sm:$0xff]
  %v1743 = vld [vmem:[%s1725 + $0x88] sm:$0xff]
  %v1744 = vld [vmem:[%s1725 + $0x90] sm:$0xff]
  %v1745 = vld [vmem:[%s1725 + $0x98] sm:$0xff]
  %v1746 = vld [vmem:[%s1725 + $0xa0] sm:$0xff]
  %v1747 = vld [vmem:[%s1725 + $0xa8] sm:$0xff]
  %v1748 = vld [vmem:[%s1725 + $0xb0] sm:$0xff]
  %v1749 = vld [vmem:[%s1725 + $0xb8] sm:$0xff]
  %v1750 = vld [vmem:[%s1725 + $0xc0] sm:$0xff]
  %v1751 = vld [vmem:[%s1725 + $0xc8] sm:$0xff]
  %v1752 = vld [vmem:[%s1725 + $0xd0] sm:$0xff]
  %v1753 = vld [vmem:[%s1725 + $0xd8] sm:$0xff]
  %v1754 = vld [vmem:[%s1725 + $0xe0] sm:$0xff]
  %v1755 = vld [vmem:[%s1725 + $0xe8] sm:$0xff]
  %v1756 = vld [vmem:[%s1725 + $0xf0] sm:$0xff]
  %v1757 = vld [vmem:[%s1725 + $0xf8] sm:$0xff]
  %s1758 = scalar_lea.vmem %s1, 16
  %v1759 = vld [vmem:[%s1758] sm:$0xff]
  %s1760 = scalar_lea.vmem %s2, 16
  %v1761 = vld [vmem:[%s1760] sm:$0xff]
  loop: start=0, step=1, limit=8
  $region44: #{music_rnn_forward.2} parent=0 // loop_pre_header
    _
  $region45: #{music_rnn_forward.2} parent=0 // loop_header
    %s1763 = sphi 0, %s1767
    %p1764 = scmp.ge.s32.totalorder %s1763, 8
    %v1768 = vphi %v1759, %v2014
    %v1769 = vphi %v1761, %v2012
  $region46: #{music_rnn_forward.2} parent=0 // loop_header_branch
    %1766 = sbr.rel (%p1764) target = $region50
  $region47: #{music_rnn_forward.2} parent=0 // loop_body
    %s1770 = smul.u32 %s1763, 8
    %s1771 = sshra.s32 %s1770, 3
    %s1772 = sand.u32 %s1770, 7
    %s1773 = smul.u32 %s1771, 4
    %s1774 = smul.addr %s1773, 8
    %s1775 = scalar_lea.vmem [#allocation2], %s1774
    %v1776 = vld [vmem:[%s1775] sm:$0xff]
    %v1777 = vld [vmem:[%s1775 + $0x8] sm:$0xff]
    %v1778 = vld [vmem:[%s1775 + $0x10] sm:$0xff]
    %v1779 = vld [vmem:[%s1775 + $0x18] sm:$0xff]
    %v1780 = vpack.c.bf16 %v1768, %v1768
    %v1813 = vunpack.c.l.b16 %v1726
    %v1814 = vunpack.c.h.b16 %v1726
    %v1815 = vunpack.c.l.b16 %v1727
    %v1816 = vunpack.c.h.b16 %v1727
    %v1817 = vunpack.c.l.b16 %v1728
    %v1818 = vunpack.c.h.b16 %v1728
    %v1819 = vunpack.c.l.b16 %v1729
    %v1820 = vunpack.c.h.b16 %v1729
    %v1821 = vunpack.c.l.b16 %v1730
    %v1822 = vunpack.c.h.b16 %v1730
    %v1823 = vunpack.c.l.b16 %v1731
    %v1824 = vunpack.c.h.b16 %v1731
    %v1825 = vunpack.c.l.b16 %v1732
    %v1826 = vunpack.c.h.b16 %v1732
    %v1827 = vunpack.c.l.b16 %v1733
    %v1828 = vunpack.c.h.b16 %v1733
    %v1829 = vunpack.c.l.b16 %v1734
    %v1830 = vunpack.c.h.b16 %v1734
    %v1831 = vunpack.c.l.b16 %v1735
    %v1832 = vunpack.c.h.b16 %v1735
    %v1833 = vunpack.c.l.b16 %v1736
    %v1834 = vunpack.c.h.b16 %v1736
    %v1835 = vunpack.c.l.b16 %v1737
    %v1836 = vunpack.c.h.b16 %v1737
    %v1837 = vunpack.c.l.b16 %v1738
    %v1838 = vunpack.c.h.b16 %v1738
    %v1839 = vunpack.c.l.b16 %v1739
    %v1840 = vunpack.c.h.b16 %v1739
    %v1841 = vunpack.c.l.b16 %v1740
    %v1842 = vunpack.c.h.b16 %v1740
    %v1843 = vunpack.c.l.b16 %v1741
    %v1844 = vunpack.c.h.b16 %v1741
    %v1845 = vunpack.c.l.b16 %v1742
    %v1846 = vunpack.c.h.b16 %v1742
    %v1847 = vunpack.c.l.b16 %v1743
    %v1848 = vunpack.c.h.b16 %v1743
    %v1849 = vunpack.c.l.b16 %v1744
    %v1850 = vunpack.c.h.b16 %v1744
    %v1851 = vunpack.c.l.b16 %v1745
    %v1852 = vunpack.c.h.b16 %v1745
    %v1853 = vunpack.c.l.b16 %v1746
    %v1854 = vunpack.c.h.b16 %v1746
    %v1855 = vunpack.c.l.b16 %v1747
    %v1856 = vunpack.c.h.b16 %v1747
    %v1857 = vunpack.c.l.b16 %v1748
    %v1858 = vunpack.c.h.b16 %v1748
    %v1859 = vunpack.c.l.b16 %v1749
    %v1860 = vunpack.c.h.b16 %v1749
    %v1861 = vunpack.c.l.b16 %v1750
    %v1862 = vunpack.c.h.b16 %v1750
    %v1863 = vunpack.c.l.b16 %v1751
    %v1864 = vunpack.c.h.b16 %v1751
    %v1865 = vunpack.c.l.b16 %v1752
    %v1866 = vunpack.c.h.b16 %v1752
    %v1867 = vunpack.c.l.b16 %v1753
    %v1868 = vunpack.c.h.b16 %v1753
    %v1869 = vunpack.c.l.b16 %v1754
    %v1870 = vunpack.c.h.b16 %v1754
    %v1871 = vunpack.c.l.b16 %v1755
    %v1872 = vunpack.c.h.b16 %v1755
    %v1873 = vunpack.c.l.b16 %v1756
    %v1874 = vunpack.c.h.b16 %v1756
    %v1875 = vunpack.c.l.b16 %v1757
    %v1876 = vunpack.c.h.b16 %v1757
    %v1877 = vpack.c.b16 %v1817, %v1813
    %v1878 = vpack.c.b16 %v1818, %v1814
    %v1879 = vpack.c.b16 %v1819, %v1815
    %v1880 = vpack.c.b16 %v1820, %v1816
    %v1881 = vpack.c.b16 %v1825, %v1821
    %v1882 = vpack.c.b16 %v1826, %v1822
    %v1883 = vpack.c.b16 %v1827, %v1823
    %v1884 = vpack.c.b16 %v1828, %v1824
    %v1885 = vpack.c.b16 %v1833, %v1829
    %v1886 = vpack.c.b16 %v1834, %v1830
    %v1887 = vpack.c.b16 %v1835, %v1831
    %v1888 = vpack.c.b16 %v1836, %v1832
    %v1889 = vpack.c.b16 %v1841, %v1837
    %v1890 = vpack.c.b16 %v1842, %v1838
    %v1891 = vpack.c.b16 %v1843, %v1839
    %v1892 = vpack.c.b16 %v1844, %v1840
    %v1893 = vpack.c.b16 %v1849, %v1845
    %v1894 = vpack.c.b16 %v1850, %v1846
    %v1895 = vpack.c.b16 %v1851, %v1847
    %v1896 = vpack.c.b16 %v1852, %v1848
    %v1897 = vpack.c.b16 %v1857, %v1853
    %v1898 = vpack.c.b16 %v1858, %v1854
    %v1899 = vpack.c.b16 %v1859, %v1855
    %v1900 = vpack.c.b16 %v1860, %v1856
    %v1901 = vpack.c.b16 %v1865, %v1861
    %v1902 = vpack.c.b16 %v1866, %v1862
    %v1903 = vpack.c.b16 %v1867, %v1863
    %v1904 = vpack.c.b16 %v1868, %v1864
    %v1905 = vpack.c.b16 %v1873, %v1869
    %v1906 = vpack.c.b16 %v1874, %v1870
    %v1907 = vpack.c.b16 %v1875, %v1871
    %v1908 = vpack.c.b16 %v1876, %v1872
    %1941 = vmatpush.bf16.msra.mxu0 %v1905
    %1942 = vmatpush.bf16.msra.mxu0 %v1901
    %1943 = vmatpush.bf16.msra.mxu0 %v1897
    %1944 = vmatpush.bf16.msra.mxu0 %v1893
    %1945 = vmatpush.bf16.msra.mxu0 %v1889
    %1946 = vmatpush.bf16.msra.mxu0 %v1885
    %1947 = vmatpush.bf16.msra.mxu0 %v1881
    %1948 = vmatpush.bf16.msra.mxu0 %v1877
    %1949 = vmatmul.bf16.gmra.mxu0 %v1780
    %v1950 = vpop.f32.mrf.mxu0
    %v1951 = vadd.f32 0.0, %v1950
    %v1952 = vpop.f32.mrf.mxu0
    %1953 = vdwg.mxu0
    %1954 = vmatpush.bf16.msra.mxu0 %v1906
    %1955 = vmatpush.bf16.msra.mxu0 %v1902
    %1956 = vmatpush.bf16.msra.mxu0 %v1898
    %1957 = vmatpush.bf16.msra.mxu0 %v1894
    %1958 = vmatpush.bf16.msra.mxu0 %v1890
    %1959 = vmatpush.bf16.msra.mxu0 %v1886
    %1960 = vmatpush.bf16.msra.mxu0 %v1882
    %1961 = vmatpush.bf16.msra.mxu0 %v1878
    %1962 = vmatmul.bf16.gmra.mxu0 %v1780
    %v1963 = vpop.f32.mrf.mxu0
    %v1964 = vadd.f32 0.0, %v1963
    %v1965 = vpop.f32.mrf.mxu0
    %1966 = vdwg.mxu0
    %1967 = vmatpush.bf16.msra.mxu0 %v1907
    %1968 = vmatpush.bf16.msra.mxu0 %v1903
    %1969 = vmatpush.bf16.msra.mxu0 %v1899
    %1970 = vmatpush.bf16.msra.mxu0 %v1895
    %1971 = vmatpush.bf16.msra.mxu0 %v1891
    %1972 = vmatpush.bf16.msra.mxu0 %v1887
    %1973 = vmatpush.bf16.msra.mxu0 %v1883
    %1974 = vmatpush.bf16.msra.mxu0 %v1879
    %1975 = vmatmul.bf16.gmra.mxu0 %v1780
    %v1976 = vpop.f32.mrf.mxu0
    %v1977 = vadd.f32 0.0, %v1976
    %v1978 = vpop.f32.mrf.mxu0
    %1979 = vdwg.mxu0
    %1980 = vmatpush.bf16.msra.mxu0 %v1908
    %1981 = vmatpush.bf16.msra.mxu0 %v1904
    %1982 = vmatpush.bf16.msra.mxu0 %v1900
    %1983 = vmatpush.bf16.msra.mxu0 %v1896
    %1984 = vmatpush.bf16.msra.mxu0 %v1892
    %1985 = vmatpush.bf16.msra.mxu0 %v1888
    %1986 = vmatpush.bf16.msra.mxu0 %v1884
    %1987 = vmatpush.bf16.msra.mxu0 %v1880
    %1988 = vmatmul.bf16.gmra.mxu0 %v1780
    %v1989 = vpop.f32.mrf.mxu0
    %v1990 = vadd.f32 0.0, %v1989
    %v1991 = vpop.f32.mrf.mxu0
    %1992 = vdwg.mxu0
    %v1993 = vadd.f32 %v1776, %v1951
    %v1994 = vadd.f32 %v1777, %v1964
    %v1995 = vadd.f32 %v1778, %v1977
    %v1996 = vadd.f32 %v1779, %v1990
    %v1997 = vmul.f32 %v1993, 0.5
    %v1998 = vtanh.pop %v1997
    %v1999 = vadd.f32 %v1998, 1.0
    %v2000 = vmul.f32 %v1999, 0.5
    %v2001 = vmul.f32 %v1994, 0.5
    %v2002 = vtanh.pop %v2001
    %v2003 = vadd.f32 %v2002, 1.0
    %v2004 = vmul.f32 %v2003, 0.5
    %v2005 = vtanh.pop %v1995
    %v2006 = vmul.f32 %v1996, 0.5
    %v2007 = vtanh.pop %v2006
    %v2008 = vadd.f32 %v2007, 1.0
    %v2009 = vmul.f32 %v2008, 0.5
    %v2010 = vmul.f32 %v2004, %v1769
    %v2011 = vmul.f32 %v2000, %v2005
    %v2012 = vadd.f32 %v2010, %v2011
    %v2013 = vtanh.pop %v2012
    %v2014 = vmul.f32 %v2009, %v2013
    %s2015 = scalar_lea.vmem %s7, %s1770
    %2016 = vst [vmem:[%s2015] sm:$0xff] %v2014
  $region48: #{music_rnn_forward.2} parent=0 // loop_footer
    %s1767 = sadd.s32 1, %s1763
  $region49: #{music_rnn_forward.2} parent=0 // loop_footer_branch
    %1762 = sbr.rel target = $region45
  $region50: #{music_rnn_forward.2} parent=0 // loop_exit
    _
  %s2017 = scalar_lea.vmem %s8, 16
  %2018 = vst [vmem:[%s2017] sm:$0xff] %v1768
  %s2019 = scalar_lea.vmem %s9, 16
  %2020 = vst [vmem:[%s2019] sm:$0xff] %v1769
  // Predicated region
  $region51: #{music_rnn_forward.2} parent=0 // pred_check
    _
  $region52: #{music_rnn_forward.2} parent=0 // pred_check_branch
    %2022 = sbr.rel (0) target = $region54
  $region53: #{music_rnn_forward.2} parent=0 // pred_region
    _
  $region54: #{music_rnn_forward.2} parent=0 // pred_fallthru
    _
  // Predicated region
  $region55: #{music_rnn_forward.2} parent=0 // pred_check
    _
  $region56: #{music_rnn_forward.2} parent=0 // pred_check_branch
    %2024 = sbr.rel (0) target = $region58
  $region57: #{music_rnn_forward.2} parent=0 // pred_region
    _
  $region58: #{music_rnn_forward.2} parent=0 // pred_fallthru
    _
  // Predicated region
  $region59: #{music_rnn_forward.2} parent=0 // pred_check
    _
  $region60: #{music_rnn_forward.2} parent=0 // pred_check_branch
    %2026 = sbr.rel (0) target = $region62
  $region61: #{music_rnn_forward.2} parent=0 // pred_region
    _
  $region62: #{music_rnn_forward.2} parent=0 // pred_fallthru
    _
  // Predicated region
  $region63: #{music_rnn_forward.2} parent=0 // pred_check
    _
  $region64: #{music_rnn_forward.2} parent=0 // pred_check_branch
    %2028 = sbr.rel (0) target = $region66
  $region65: #{music_rnn_forward.2} parent=0 // pred_region
    _
  $region66: #{music_rnn_forward.2} parent=0 // pred_fallthru
    _
  // Predicated region
  $region67: #{music_rnn_forward.2} parent=0 // pred_check
    _
  $region68: #{music_rnn_forward.2} parent=0 // pred_check_branch
    %2030 = sbr.rel (0) target = $region70
  $region69: #{music_rnn_forward.2} parent=0 // pred_region
    _
  $region70: #{music_rnn_forward.2} parent=0 // pred_fallthru
    _
  // Predicated region
  $region71: #{music_rnn_forward.2} parent=0 // pred_check
    _
  $region72: #{music_rnn_forward.2} parent=0 // pred_check_branch
    %2032 = sbr.rel (0) target = $region74
  $region73: #{music_rnn_forward.2} parent=0 // pred_region
    _
  $region74: #{music_rnn_forward.2} parent=0 // pred_fallthru
    _

</llo_original>
